<compile_context>
chip_gen: v6e
topology: v6e:2x2x1
jax: 0.10.0
libtpu: 0.0.40
codegen_flags: <defaults>
</compile_context>

<pallas_src>
import functools
import math

import jax
import jax.numpy as jnp
from jax.experimental import pallas as pl
from jax.experimental.pallas import tpu as pltpu

EPSILON = 1e-8          # module-level EPSILON from the reference code
LN_EPS = 1e-5           # torch.nn.LayerNorm default eps
NEG_INF = -1e9          # finite stand-in for the -inf causal mask entries


# TODO(synk): PyTorch F.gelu is erf-based; the tanh approximation is used here
# (erf lowering is not guaranteed on Mosaic). Same formula in kernel & reference.
def _gelu_tanh(x):
    c = math.sqrt(2.0 / math.pi)
    return 0.5 * x * (1.0 + jnp.tanh(c * (x + 0.044715 * x * x * x)))


def _layer_norm(y, gamma, beta):
    mu = jnp.mean(y, axis=-1, keepdims=True)
    var = jnp.mean((y - mu) * (y - mu), axis=-1, keepdims=True)
    return (y - mu) * jax.lax.rsqrt(var + LN_EPS) * gamma + beta


# --------------------------------------------------------------------------- #
# Fused SpecialTransformerEncoder layer kernel (one batch element per grid step)
# --------------------------------------------------------------------------- #
def _special_encoder_layer_kernel(
    x_ref, mask_ref, qe_ref, ke_ref, ve_ref,
    w0_ref, b0_ref,
    wq_ref, bq_ref, wk_ref, bk_ref, wv_ref, bv_ref,
    wo_ref, bo_ref,
    g1_ref, be1_ref,
    w1_ref, b1_ref, w2_ref, b2_ref,
    g2_ref, be2_ref,
    o_ref,
    *, nheads, head_dim, dh):
    x = x_ref[...]                                   # (S, d) f32
    mask = mask_ref[...]                             # (S, S) additive causal mask

    # linear0: d -> d/2
    src1 = jnp.dot(x, w0_ref[...], preferred_element_type=jnp.float32) + b0_ref[...]

    # Q/K/V of MultiheadAttention on cat([src1, emb], -1):
    #   cat([src1, emb]) @ W^T  ==  src1 @ W^T[:dh] + emb @ W^T[dh:]
    def _proj(e_ref, w_ref, b_ref):
        w = w_ref[...]
        return (jnp.dot(src1, w[:dh, :], preferred_element_type=jnp.float32)
                + jnp.dot(e_ref[...], w[dh:, :], preferred_element_type=jnp.float32)
                + b_ref[...])

    q = _proj(qe_ref, wq_ref, bq_ref)                # (S, d)
    k = _proj(ke_ref, wk_ref, bk_ref)
    v = _proj(ve_ref, wv_ref, bv_ref)

    wo = wo_ref[...]
    scale = 1.0 / math.sqrt(head_dim)
    attn = jnp.zeros_like(x)
    for h in range(nheads):                          # static, tiny head count
        lo, hi = h * head_dim, (h + 1) * head_dim
        qh = q[:, lo:hi] * scale
        kh = k[:, lo:hi]
        vh = v[:, lo:hi]
        s = jax.lax.dot_general(qh, kh, (((1,), (1,)), ((), ())),
                                preferred_element_type=jnp.float32) + mask
        m = jnp.max(s, axis=-1, keepdims=True)
        p = jnp.exp(s - m)
        p = p / jnp.sum(p, axis=-1, keepdims=True)
        oh = jnp.dot(p, vh, preferred_element_type=jnp.float32)
        # fold out_proj per head: concat(heads) @ Wo^T == sum_h O_h @ Wo^T[h*hd:(h+1)*hd]
        attn = attn + jnp.dot(oh, wo[lo:hi, :], preferred_element_type=jnp.float32)
    attn = attn + bo_ref[...]

    # post-norm residual + GELU FFN + post-norm residual
    x1 = _layer_norm(x + attn, g1_ref[...], be1_ref[...])
    hff = _gelu_tanh(jnp.dot(x1, w1_ref[...], preferred_element_type=jnp.float32)
                     + b1_ref[...])
    hff = jnp.dot(hff, w2_ref[...], preferred_element_type=jnp.float32) + b2_ref[...]
    x2 = _layer_norm(x1 + hff, g2_ref[...], be2_ref[...])
    o_ref[...] = x2.astype(o_ref.dtype)


def _full_spec(a):
    # Whole-array block (last two dims equal the full dims -> (8,128) rule OK).
    return pl.BlockSpec(a.shape, lambda b, n=a.ndim: (0,) * n)


def special_encoder_layer(h, mask, lw, *, nheads):
    """One SpecialTransformerEncoder layer.  h: (B, S, d) -> (B, S, d)."""
    B, S, d = h.shape
    dh = d // 2
    head_dim = d // nheads

    weights = (mask,
               lw["qe"], lw["ke"], lw["ve"],
               lw["w0t"], lw["b0"],
               lw["wqt"], lw["bq"], lw["wkt"], lw["bk"], lw["wvt"], lw["bv"],
               lw["wot"], lw["bo"],
               lw["g1"], lw["be1"],
               lw["w1t"], lw["b1"], lw["w2t"], lw["b2"],
               lw["g2"], lw["be2"])

    in_specs = ([pl.BlockSpec((None, S, d), lambda b: (b, 0, 0))]
                + [_full_spec(w) for w in weights])
    out_specs = pl.BlockSpec((None, S, d), lambda b: (b, 0, 0))

    # Advisory cost estimate so XLA can overlap neighbouring work.
    per_b = (2 * S * d * dh                  # linear0
             + 3 * 4 * S * dh * d            # q/k/v (two dh-matmuls each)
             + 4 * S * S * d                 # scores + P@V over all heads
             + 2 * S * d * d                 # out-projection (folded)
             + 4 * S * d * d)                # FFN (dim_feedforward == d)
    flops = int(B * per_b)
    transcendentals = int(B * (nheads * S * S + 2 * S * d + 4 * S))
    bytes_accessed = int(4 * (2 * B * S * d + sum(int(w.size) for w in weights)))

    kernel = functools.partial(_special_encoder_layer_kernel,
                               nheads=nheads, head_dim=head_dim, dh=dh)
    return pl.pallas_call(
        kernel,
        out_shape=jax.ShapeDtypeStruct((B, S, d), h.dtype),
        grid_spec=pltpu.PrefetchScalarGridSpec(
            num_scalar_prefetch=0,
            grid=(B,),
            in_specs=in_specs,
            out_specs=out_specs,
        ),
        compiler_params=pltpu.CompilerParams(
            dimension_semantics=("parallel",)),
        cost_estimate=pl.CostEstimate(flops=flops,
                                      transcendentals=transcendentals,
                                      bytes_accessed=bytes_accessed),
    )(h, *weights)


# --------------------------------------------------------------------------- #
# z-parameter heads kernel: loc = Linear + EPS, scale = softplus(Linear) + EPS
# --------------------------------------------------------------------------- #
def _z_heads_kernel(x_ref, wl_ref, bl_ref, ws_ref, bs_ref, loc_ref, scale_ref):
    x = x_ref[...]                                   # (B*S, d)
    loc = jnp.dot(x, wl_ref[...], preferred_element_type=jnp.float32) + bl_ref[...]
    loc_ref[...] = (loc + EPSILON).astype(loc_ref.dtype)
    s = jnp.dot(x, ws_ref[...], preferred_element_type=jnp.float32) + bs_ref[...]
    scale_ref[...] = (jnp.log(1.0 + jnp.exp(s)) + EPSILON).astype(scale_ref.dtype)


def z_heads(flat, hw):
    N, d = flat.shape
    zpm = hw["wlt"].shape[1]
    args = (flat, hw["wlt"], hw["bl"], hw["wst"], hw["bs"])
    return pl.pallas_call(
        _z_heads_kernel,
        out_shape=(jax.ShapeDtypeStruct((N, zpm), flat.dtype),
                   jax.ShapeDtypeStruct((N, zpm), flat.dtype)),
        grid_spec=pltpu.PrefetchScalarGridSpec(
            num_scalar_prefetch=0,
            grid=(1,),
            in_specs=[_full_spec(a) for a in args],
            out_specs=(pl.BlockSpec((N, zpm), lambda i: (0, 0)),
                       pl.BlockSpec((N, zpm), lambda i: (0, 0))),
        ),
    )(*args)


# --------------------------------------------------------------------------- #
# Full forward (ConditionalCoattentiveTransformerLink2.forward, memory=None)
# --------------------------------------------------------------------------- #
def ccttl2_forward(x, params, *, targets, tn_mems, nheads, z_size,
                   bidirectional=False, z_prev=None, lens=None):
    del z_prev, lens  # unused, as in the reference forward
    tgt = jnp.concatenate([x[k] for k in targets], axis=-1)   # (B, L, tn_mems*d)
    seq_len = tgt.shape[-2]
    tgt = tgt[..., 0, :]                                      # first time-step
    d = params["pe"].shape[-1]
    B = tgt.shape[0]
    h = tgt.reshape(B, tn_mems, d)
    h = h + params["pe"][None, :, :]                          # positional embeddings

    r = jnp.arange(tn_mems)
    if not bidirectional:
        mask = jnp.where(r[:, None] >= r[None, :], 0.0, NEG_INF).astype(jnp.float32)
    else:
        mask = jnp.zeros((tn_mems, tn_mems), jnp.float32)

    for lw in params["layers"]:
        h = special_encoder_layer(h, mask, lw, nheads=nheads)

    zpm = z_size // tn_mems
    loc, scale = z_heads(h.reshape(B * tn_mems, d), params["heads"])
    loc = jnp.broadcast_to(loc.reshape(B, 1, tn_mems * zpm),
                           (B, seq_len, tn_mems * zpm))
    scale = jnp.broadcast_to(scale.reshape(B, 1, tn_mems * zpm),
                             (B, seq_len, tn_mems * zpm))
    return {"loc": loc, "scale": scale}


# --------------------------------------------------------------------------- #
# Pure-JAX reference (same math, no Pallas) for validation
# --------------------------------------------------------------------------- #
def ccttl2_reference(x, params, *, targets, tn_mems, nheads, z_size,
                     bidirectional=False):
    P = jax.lax.Precision.HIGHEST
    tgt = jnp.concatenate([x[k] for k in targets], axis=-1)
    seq_len = tgt.shape[-2]
    tgt = tgt[..., 0, :]
    d = params["pe"].shape[-1]
    dh = d // 2
    hd = d // nheads
    B = tgt.shape[0]
    h = tgt.reshape(B, tn_mems, d) + params["pe"][None]

    r = jnp.arange(tn_mems)
    mask = (jnp.where(r[:, None] >= r[None, :], 0.0, NEG_INF).astype(jnp.float32)
            if not bidirectional else jnp.zeros((tn_mems, tn_mems), jnp.float32))

    for lw in params["layers"]:
        src1 = jnp.einsum("bsd,de->bse", h, lw["w0t"], precision=P) + lw["b0"]

        def proj(e, wt, b):
            return (jnp.einsum("bse,ef->bsf", src1, wt[:dh], precision=P)
                    + jnp.einsum("se,ef->sf", e, wt[dh:], precision=P)[None]
                    + b)

        q = proj(lw["qe"], lw["wqt"], lw["bq"]).reshape(B, tn_mems, nheads, hd)
        k = proj(lw["ke"], lw["wkt"], lw["bk"]).reshape(B, tn_mems, nheads, hd)
        v = proj(lw["ve"], lw["wvt"], lw["bv"]).reshape(B, tn_mems, nheads, hd)
        s = (jnp.einsum("bqhd,bkhd->bhqk", q, k, precision=P) / math.sqrt(hd)
             + mask[None, None])
        p = jax.nn.softmax(s, axis=-1)
        o = jnp.einsum("bhqk,bkhd->bqhd", p, v, precision=P).reshape(B, tn_mems, d)
        attn = jnp.einsum("bsd,de->bse", o, lw["wot"], precision=P) + lw["bo"]
        x1 = _layer_norm(h + attn, lw["g1"], lw["be1"])
        ff = _gelu_tanh(jnp.einsum("bsd,df->bsf", x1, lw["w1t"], precision=P)
                        + lw["b1"])
        ff = jnp.einsum("bsf,fd->bsd", ff, lw["w2t"], precision=P) + lw["b2"]
        h = _layer_norm(x1 + ff, lw["g2"], lw["be2"])

    hw = params["heads"]
    loc = jnp.einsum("bsd,dz->bsz", h, hw["wlt"], precision=P) + hw["bl"] + EPSILON
    sc = jnp.einsum("bsd,dz->bsz", h, hw["wst"], precision=P) + hw["bs"]
    sc = jnp.log(1.0 + jnp.exp(sc)) + EPSILON
    zpm = z_size // tn_mems
    loc = jnp.broadcast_to(loc.reshape(B, 1, tn_mems * zpm),
                           (B, seq_len, tn_mems * zpm))
    sc = jnp.broadcast_to(sc.reshape(B, 1, tn_mems * zpm),
                          (B, seq_len, tn_mems * zpm))
    return {"loc": loc, "scale": sc}


# --------------------------------------------------------------------------- #
if __name__ == "__main__":
    key = jax.random.PRNGKey(0)

    # Module config: output_size(total)=256, tn_mems=8 -> d_model=32, z_size=64,
    # nheads=2, depth=2, dropout=0.0, memory=None, embedding=None, batchnorm=False.
    tn_mems, d_model, z_size, nheads, depth = 8, 32, 64, 2, 2
    B, seq_len = 2, 4
    targets = ("t1", "t2")
    dh = d_model // 2
    zpm = z_size // tn_mems

    keys = iter(jax.random.split(key, 64))

    def nrm(shape, scale=0.2):
        return scale * jax.random.normal(next(keys), shape, dtype=jnp.float32)

    layers = []
    for _ in range(depth):
        layers.append(dict(
            qe=nrm((tn_mems, dh)), ke=nrm((tn_mems, dh)), ve=nrm((tn_mems, dh)),
            w0t=nrm((d_model, dh)), b0=nrm((1, dh), 0.05),
            wqt=nrm((d_model, d_model)), bq=nrm((1, d_model), 0.05),
            wkt=nrm((d_model, d_model)), bk=nrm((1, d_model), 0.05),
            wvt=nrm((d_model, d_model)), bv=nrm((1, d_model), 0.05),
            wot=nrm((d_model, d_model)), bo=nrm((1, d_model), 0.05),
            g1=jnp.ones((1, d_model), jnp.float32),
            be1=jnp.zeros((1, d_model), jnp.float32),
            w1t=nrm((d_model, d_model)), b1=nrm((1, d_model), 0.05),
            w2t=nrm((d_model, d_model)), b2=nrm((1, d_model), 0.05),
            g2=jnp.ones((1, d_model), jnp.float32),
            be2=jnp.zeros((1, d_model), jnp.float32),
        ))
    heads = dict(wlt=nrm((d_model, zpm)), bl=nrm((1, zpm), 0.05),
                 wst=nrm((d_model, zpm)), bs=nrm((1, zpm), 0.05))
    params = dict(pe=nrm((tn_mems, d_model)), layers=layers, heads=heads)

    feat = tn_mems * d_model // 2                     # 128 per target entry
    x = {"t1": jax.random.normal(next(keys), (B, seq_len, feat), jnp.float32),
         "t2": jax.random.normal(next(keys), (B, seq_len, feat), jnp.float32)}

    out = ccttl2_forward(x, params, targets=targets, tn_mems=tn_mems,
                         nheads=nheads, z_size=z_size)
    out = jax.tree_util.tree_map(jax.block_until_ready, out)

    ref = ccttl2_reference(x, params, targets=targets, tn_mems=tn_mems,
                           nheads=nheads, z_size=z_size)

    for name in ("loc", "scale"):
        assert out[name].shape == (B, seq_len, z_size), out[name].shape
        assert bool(jnp.all(jnp.isfinite(out[name])))
        assert jnp.allclose(out[name], ref[name], atol=2e-3, rtol=2e-3), name
    print("KERNEL_OK")
</pallas_src>

<mosaic_0001>
module attributes {stable_mosaic.version = 11 : i64} {
  func.func @_special_encoder_layer_kernel(%arg0: i32, %arg1: memref<1x8x32xf32, #tpu.memory_space<vmem>>, %arg2: memref<8x8xf32, #tpu.memory_space<vmem>>, %arg3: memref<8x16xf32, #tpu.memory_space<vmem>>, %arg4: memref<8x16xf32, #tpu.memory_space<vmem>>, %arg5: memref<8x16xf32, #tpu.memory_space<vmem>>, %arg6: memref<32x16xf32, #tpu.memory_space<vmem>>, %arg7: memref<1x16xf32, #tpu.memory_space<vmem>>, %arg8: memref<32x32xf32, #tpu.memory_space<vmem>>, %arg9: memref<1x32xf32, #tpu.memory_space<vmem>>, %arg10: memref<32x32xf32, #tpu.memory_space<vmem>>, %arg11: memref<1x32xf32, #tpu.memory_space<vmem>>, %arg12: memref<32x32xf32, #tpu.memory_space<vmem>>, %arg13: memref<1x32xf32, #tpu.memory_space<vmem>>, %arg14: memref<32x32xf32, #tpu.memory_space<vmem>>, %arg15: memref<1x32xf32, #tpu.memory_space<vmem>>, %arg16: memref<1x32xf32, #tpu.memory_space<vmem>>, %arg17: memref<1x32xf32, #tpu.memory_space<vmem>>, %arg18: memref<32x32xf32, #tpu.memory_space<vmem>>, %arg19: memref<1x32xf32, #tpu.memory_space<vmem>>, %arg20: memref<32x32xf32, #tpu.memory_space<vmem>>, %arg21: memref<1x32xf32, #tpu.memory_space<vmem>>, %arg22: memref<1x32xf32, #tpu.memory_space<vmem>>, %arg23: memref<1x32xf32, #tpu.memory_space<vmem>>, %arg24: memref<1x8x32xf32, #tpu.memory_space<vmem>>) attributes {dimension_semantics = [#tpu.dimension_semantics<parallel>], iteration_bounds = array<i64: 2>, scalar_prefetch = 0 : i64, scratch_operands = 0 : i64, tpu.core_type = #tpu.core_type<tc>, window_params = [{transform_indices = @transform_0, window_bounds = array<i64: 1, 8, 32>}, {pipeline_mode = #tpu.pipeline_mode<synchronous>, transform_indices = @transform_1, window_bounds = array<i64: 8, 8>}, {pipeline_mode = #tpu.pipeline_mode<synchronous>, transform_indices = @transform_2, window_bounds = array<i64: 8, 16>}, {pipeline_mode = #tpu.pipeline_mode<synchronous>, transform_indices = @transform_3, window_bounds = array<i64: 8, 16>}, {pipeline_mode = #tpu.pipeline_mode<synchronous>, transform_indices = @transform_4, window_bounds = array<i64: 8, 16>}, {pipeline_mode = #tpu.pipeline_mode<synchronous>, transform_indices = @transform_5, window_bounds = array<i64: 32, 16>}, {pipeline_mode = #tpu.pipeline_mode<synchronous>, transform_indices = @transform_6, window_bounds = array<i64: 1, 16>}, {pipeline_mode = #tpu.pipeline_mode<synchronous>, transform_indices = @transform_7, window_bounds = array<i64: 32, 32>}, {pipeline_mode = #tpu.pipeline_mode<synchronous>, transform_indices = @transform_8, window_bounds = array<i64: 1, 32>}, {pipeline_mode = #tpu.pipeline_mode<synchronous>, transform_indices = @transform_9, window_bounds = array<i64: 32, 32>}, {pipeline_mode = #tpu.pipeline_mode<synchronous>, transform_indices = @transform_10, window_bounds = array<i64: 1, 32>}, {pipeline_mode = #tpu.pipeline_mode<synchronous>, transform_indices = @transform_11, window_bounds = array<i64: 32, 32>}, {pipeline_mode = #tpu.pipeline_mode<synchronous>, transform_indices = @transform_12, window_bounds = array<i64: 1, 32>}, {pipeline_mode = #tpu.pipeline_mode<synchronous>, transform_indices = @transform_13, window_bounds = array<i64: 32, 32>}, {pipeline_mode = #tpu.pipeline_mode<synchronous>, transform_indices = @transform_14, window_bounds = array<i64: 1, 32>}, {pipeline_mode = #tpu.pipeline_mode<synchronous>, transform_indices = @transform_15, window_bounds = array<i64: 1, 32>}, {pipeline_mode = #tpu.pipeline_mode<synchronous>, transform_indices = @transform_16, window_bounds = array<i64: 1, 32>}, {pipeline_mode = #tpu.pipeline_mode<synchronous>, transform_indices = @transform_17, window_bounds = array<i64: 32, 32>}, {pipeline_mode = #tpu.pipeline_mode<synchronous>, transform_indices = @transform_18, window_bounds = array<i64: 1, 32>}, {pipeline_mode = #tpu.pipeline_mode<synchronous>, transform_indices = @transform_19, window_bounds = array<i64: 32, 32>}, {pipeline_mode = #tpu.pipeline_mode<synchronous>, transform_indices = @transform_20, window_bounds = array<i64: 1, 32>}, {pipeline_mode = #tpu.pipeline_mode<synchronous>, transform_indices = @transform_21, window_bounds = array<i64: 1, 32>}, {pipeline_mode = #tpu.pipeline_mode<synchronous>, transform_indices = @transform_22, window_bounds = array<i64: 1, 32>}, {transform_indices = @transform_23, window_bounds = array<i64: 1, 8, 32>}]} {
    %c0 = arith.constant 0 : index
    %c0_0 = arith.constant 0 : index
    %c0_1 = arith.constant 0 : index
    %0 = vector.load %arg1[%c0, %c0_0, %c0_1] : memref<1x8x32xf32, #tpu.memory_space<vmem>>, vector<1x8x32xf32>
    %1 = vector.shape_cast %0 : vector<1x8x32xf32> to vector<8x32xf32>
    %c0_2 = arith.constant 0 : index
    %c0_3 = arith.constant 0 : index
    %2 = vector.load %arg2[%c0_2, %c0_3] : memref<8x8xf32, #tpu.memory_space<vmem>>, vector<8x8xf32>
    %c0_4 = arith.constant 0 : index
    %c0_5 = arith.constant 0 : index
    %3 = vector.load %arg6[%c0_4, %c0_5] : memref<32x16xf32, #tpu.memory_space<vmem>>, vector<32x16xf32>
    %cst = arith.constant dense<0.000000e+00> : vector<8x16xf32>
    %4 = tpu.matmul %1, %3, %cst {dimension_numbers = #tpu.dot_dimension_numbers<[1], [0], [0], [1], [0, 0, 1, 1], [], []>} : vector<8x32xf32>, vector<32x16xf32>, vector<8x16xf32> -> vector<8x16xf32>
    %c0_6 = arith.constant 0 : index
    %c0_7 = arith.constant 0 : index
    %5 = vector.load %arg7[%c0_6, %c0_7] : memref<1x16xf32, #tpu.memory_space<vmem>>, vector<1x16xf32>
    %6 = vector.broadcast %5 : vector<1x16xf32> to vector<8x16xf32>
    %7 = arith.addf %4, %6 : vector<8x16xf32>
    %c0_8 = arith.constant 0 : index
    %c0_9 = arith.constant 0 : index
    %8 = vector.load %arg8[%c0_8, %c0_9] : memref<32x32xf32, #tpu.memory_space<vmem>>, vector<32x32xf32>
    %9 = vector.extract_strided_slice %8 {offsets = [0, 0], sizes = [16, 32], strides = [1, 1]} : vector<32x32xf32> to vector<16x32xf32>
    %cst_10 = arith.constant dense<0.000000e+00> : vector<8x32xf32>
    %10 = tpu.matmul %7, %9, %cst_10 {dimension_numbers = #tpu.dot_dimension_numbers<[1], [0], [0], [1], [0, 0, 1, 1], [], []>} : vector<8x16xf32>, vector<16x32xf32>, vector<8x32xf32> -> vector<8x32xf32>
    %c0_11 = arith.constant 0 : index
    %c0_12 = arith.constant 0 : index
    %11 = vector.load %arg3[%c0_11, %c0_12] : memref<8x16xf32, #tpu.memory_space<vmem>>, vector<8x16xf32>
    %12 = vector.extract_strided_slice %8 {offsets = [16, 0], sizes = [16, 32], strides = [1, 1]} : vector<32x32xf32> to vector<16x32xf32>
    %cst_13 = arith.constant dense<0.000000e+00> : vector<8x32xf32>
    %13 = tpu.matmul %11, %12, %cst_13 {dimension_numbers = #tpu.dot_dimension_numbers<[1], [0], [0], [1], [0, 0, 1, 1], [], []>} : vector<8x16xf32>, vector<16x32xf32>, vector<8x32xf32> -> vector<8x32xf32>
    %14 = arith.addf %10, %13 : vector<8x32xf32>
    %c0_14 = arith.constant 0 : index
    %c0_15 = arith.constant 0 : index
    %15 = vector.load %arg9[%c0_14, %c0_15] : memref<1x32xf32, #tpu.memory_space<vmem>>, vector<1x32xf32>
    %16 = vector.broadcast %15 : vector<1x32xf32> to vector<8x32xf32>
    %17 = arith.addf %14, %16 : vector<8x32xf32>
    %c0_16 = arith.constant 0 : index
    %c0_17 = arith.constant 0 : index
    %18 = vector.load %arg10[%c0_16, %c0_17] : memref<32x32xf32, #tpu.memory_space<vmem>>, vector<32x32xf32>
    %19 = vector.extract_strided_slice %18 {offsets = [0, 0], sizes = [16, 32], strides = [1, 1]} : vector<32x32xf32> to vector<16x32xf32>
    %cst_18 = arith.constant dense<0.000000e+00> : vector<8x32xf32>
    %20 = tpu.matmul %7, %19, %cst_18 {dimension_numbers = #tpu.dot_dimension_numbers<[1], [0], [0], [1], [0, 0, 1, 1], [], []>} : vector<8x16xf32>, vector<16x32xf32>, vector<8x32xf32> -> vector<8x32xf32>
    %c0_19 = arith.constant 0 : index
    %c0_20 = arith.constant 0 : index
    %21 = vector.load %arg4[%c0_19, %c0_20] : memref<8x16xf32, #tpu.memory_space<vmem>>, vector<8x16xf32>
    %22 = vector.extract_strided_slice %18 {offsets = [16, 0], sizes = [16, 32], strides = [1, 1]} : vector<32x32xf32> to vector<16x32xf32>
    %cst_21 = arith.constant dense<0.000000e+00> : vector<8x32xf32>
    %23 = tpu.matmul %21, %22, %cst_21 {dimension_numbers = #tpu.dot_dimension_numbers<[1], [0], [0], [1], [0, 0, 1, 1], [], []>} : vector<8x16xf32>, vector<16x32xf32>, vector<8x32xf32> -> vector<8x32xf32>
    %24 = arith.addf %20, %23 : vector<8x32xf32>
    %c0_22 = arith.constant 0 : index
    %c0_23 = arith.constant 0 : index
    %25 = vector.load %arg11[%c0_22, %c0_23] : memref<1x32xf32, #tpu.memory_space<vmem>>, vector<1x32xf32>
    %26 = vector.broadcast %25 : vector<1x32xf32> to vector<8x32xf32>
    %27 = arith.addf %24, %26 : vector<8x32xf32>
    %c0_24 = arith.constant 0 : index
    %c0_25 = arith.constant 0 : index
    %28 = vector.load %arg12[%c0_24, %c0_25] : memref<32x32xf32, #tpu.memory_space<vmem>>, vector<32x32xf32>
    %29 = vector.extract_strided_slice %28 {offsets = [0, 0], sizes = [16, 32], strides = [1, 1]} : vector<32x32xf32> to vector<16x32xf32>
    %cst_26 = arith.constant dense<0.000000e+00> : vector<8x32xf32>
    %30 = tpu.matmul %7, %29, %cst_26 {dimension_numbers = #tpu.dot_dimension_numbers<[1], [0], [0], [1], [0, 0, 1, 1], [], []>} : vector<8x16xf32>, vector<16x32xf32>, vector<8x32xf32> -> vector<8x32xf32>
    %c0_27 = arith.constant 0 : index
    %c0_28 = arith.constant 0 : index
    %31 = vector.load %arg5[%c0_27, %c0_28] : memref<8x16xf32, #tpu.memory_space<vmem>>, vector<8x16xf32>
    %32 = vector.extract_strided_slice %28 {offsets = [16, 0], sizes = [16, 32], strides = [1, 1]} : vector<32x32xf32> to vector<16x32xf32>
    %cst_29 = arith.constant dense<0.000000e+00> : vector<8x32xf32>
    %33 = tpu.matmul %31, %32, %cst_29 {dimension_numbers = #tpu.dot_dimension_numbers<[1], [0], [0], [1], [0, 0, 1, 1], [], []>} : vector<8x16xf32>, vector<16x32xf32>, vector<8x32xf32> -> vector<8x32xf32>
    %34 = arith.addf %30, %33 : vector<8x32xf32>
    %c0_30 = arith.constant 0 : index
    %c0_31 = arith.constant 0 : index
    %35 = vector.load %arg13[%c0_30, %c0_31] : memref<1x32xf32, #tpu.memory_space<vmem>>, vector<1x32xf32>
    %36 = vector.broadcast %35 : vector<1x32xf32> to vector<8x32xf32>
    %37 = arith.addf %34, %36 : vector<8x32xf32>
    %c0_32 = arith.constant 0 : index
    %c0_33 = arith.constant 0 : index
    %38 = vector.load %arg14[%c0_32, %c0_33] : memref<32x32xf32, #tpu.memory_space<vmem>>, vector<32x32xf32>
    %cst_34 = arith.constant 0.000000e+00 : f32
    %39 = vector.broadcast %cst_34 : f32 to vector<8x32xf32>
    %40 = vector.extract_strided_slice %17 {offsets = [0, 0], sizes = [8, 16], strides = [1, 1]} : vector<8x32xf32> to vector<8x16xf32>
    %cst_35 = arith.constant 2.500000e-01 : f32
    %41 = vector.broadcast %cst_35 : f32 to vector<8x16xf32>
    %42 = arith.mulf %40, %41 : vector<8x16xf32>
    %43 = vector.extract_strided_slice %27 {offsets = [0, 0], sizes = [8, 16], strides = [1, 1]} : vector<8x32xf32> to vector<8x16xf32>
    %44 = vector.extract_strided_slice %37 {offsets = [0, 0], sizes = [8, 16], strides = [1, 1]} : vector<8x32xf32> to vector<8x16xf32>
    %cst_36 = arith.constant dense<0.000000e+00> : vector<8x8xf32>
    %45 = tpu.matmul %42, %43, %cst_36 {dimension_numbers = #tpu.dot_dimension_numbers<[1], [1], [0], [0], [0, 0, 1, 0], [], []>} : vector<8x16xf32>, vector<8x16xf32>, vector<8x8xf32> -> vector<8x8xf32>
    %46 = arith.addf %45, %2 : vector<8x8xf32>
    %cst_37 = arith.constant dense<0xFF800000> : vector<8xf32>
    %47 = vector.multi_reduction <maximumf>, %46, %cst_37 [1] : vector<8x8xf32> to vector<8xf32>
    %48 = vector.shape_cast %47 : vector<8xf32> to vector<8x1xf32>
    %49 = vector.broadcast %48 : vector<8x1xf32> to vector<8x8xf32>
    %50 = arith.subf %46, %49 : vector<8x8xf32>
    %51 = math.exp %50 : vector<8x8xf32>
    %cst_38 = arith.constant dense<0.000000e+00> : vector<8xf32>
    %52 = vector.multi_reduction <add>, %51, %cst_38 [1] : vector<8x8xf32> to vector<8xf32>
    %53 = vector.shape_cast %52 : vector<8xf32> to vector<8x1xf32>
    %54 = vector.broadcast %53 : vector<8x1xf32> to vector<8x8xf32>
    %55 = arith.divf %51, %54 : vector<8x8xf32>
    %cst_39 = arith.constant dense<0.000000e+00> : vector<8x16xf32>
    %56 = tpu.matmul %55, %44, %cst_39 {dimension_numbers = #tpu.dot_dimension_numbers<[1], [0], [0], [1], [0, 0, 1, 1], [], []>} : vector<8x8xf32>, vector<8x16xf32>, vector<8x16xf32> -> vector<8x16xf32>
    %57 = vector.extract_strided_slice %38 {offsets = [0, 0], sizes = [16, 32], strides = [1, 1]} : vector<32x32xf32> to vector<16x32xf32>
    %cst_40 = arith.constant dense<0.000000e+00> : vector<8x32xf32>
    %58 = tpu.matmul %56, %57, %cst_40 {dimension_numbers = #tpu.dot_dimension_numbers<[1], [0], [0], [1], [0, 0, 1, 1], [], []>} : vector<8x16xf32>, vector<16x32xf32>, vector<8x32xf32> -> vector<8x32xf32>
    %59 = arith.addf %39, %58 : vector<8x32xf32>
    %60 = vector.extract_strided_slice %17 {offsets = [0, 16], sizes = [8, 16], strides = [1, 1]} : vector<8x32xf32> to vector<8x16xf32>
    %cst_41 = arith.constant 2.500000e-01 : f32
    %61 = vector.broadcast %cst_41 : f32 to vector<8x16xf32>
    %62 = arith.mulf %60, %61 : vector<8x16xf32>
    %63 = vector.extract_strided_slice %27 {offsets = [0, 16], sizes = [8, 16], strides = [1, 1]} : vector<8x32xf32> to vector<8x16xf32>
    %64 = vector.extract_strided_slice %37 {offsets = [0, 16], sizes = [8, 16], strides = [1, 1]} : vector<8x32xf32> to vector<8x16xf32>
    %cst_42 = arith.constant dense<0.000000e+00> : vector<8x8xf32>
    %65 = tpu.matmul %62, %63, %cst_42 {dimension_numbers = #tpu.dot_dimension_numbers<[1], [1], [0], [0], [0, 0, 1, 0], [], []>} : vector<8x16xf32>, vector<8x16xf32>, vector<8x8xf32> -> vector<8x8xf32>
    %66 = arith.addf %65, %2 : vector<8x8xf32>
    %cst_43 = arith.constant dense<0xFF800000> : vector<8xf32>
    %67 = vector.multi_reduction <maximumf>, %66, %cst_43 [1] : vector<8x8xf32> to vector<8xf32>
    %68 = vector.shape_cast %67 : vector<8xf32> to vector<8x1xf32>
    %69 = vector.broadcast %68 : vector<8x1xf32> to vector<8x8xf32>
    %70 = arith.subf %66, %69 : vector<8x8xf32>
    %71 = math.exp %70 : vector<8x8xf32>
    %cst_44 = arith.constant dense<0.000000e+00> : vector<8xf32>
    %72 = vector.multi_reduction <add>, %71, %cst_44 [1] : vector<8x8xf32> to vector<8xf32>
    %73 = vector.shape_cast %72 : vector<8xf32> to vector<8x1xf32>
    %74 = vector.broadcast %73 : vector<8x1xf32> to vector<8x8xf32>
    %75 = arith.divf %71, %74 : vector<8x8xf32>
    %cst_45 = arith.constant dense<0.000000e+00> : vector<8x16xf32>
    %76 = tpu.matmul %75, %64, %cst_45 {dimension_numbers = #tpu.dot_dimension_numbers<[1], [0], [0], [1], [0, 0, 1, 1], [], []>} : vector<8x8xf32>, vector<8x16xf32>, vector<8x16xf32> -> vector<8x16xf32>
    %77 = vector.extract_strided_slice %38 {offsets = [16, 0], sizes = [16, 32], strides = [1, 1]} : vector<32x32xf32> to vector<16x32xf32>
    %cst_46 = arith.constant dense<0.000000e+00> : vector<8x32xf32>
    %78 = tpu.matmul %76, %77, %cst_46 {dimension_numbers = #tpu.dot_dimension_numbers<[1], [0], [0], [1], [0, 0, 1, 1], [], []>} : vector<8x16xf32>, vector<16x32xf32>, vector<8x32xf32> -> vector<8x32xf32>
    %79 = arith.addf %59, %78 : vector<8x32xf32>
    %c0_47 = arith.constant 0 : index
    %c0_48 = arith.constant 0 : index
    %80 = vector.load %arg15[%c0_47, %c0_48] : memref<1x32xf32, #tpu.memory_space<vmem>>, vector<1x32xf32>
    %81 = vector.broadcast %80 : vector<1x32xf32> to vector<8x32xf32>
    %82 = arith.addf %79, %81 : vector<8x32xf32>
    %83 = arith.addf %1, %82 : vector<8x32xf32>
    %c0_49 = arith.constant 0 : index
    %c0_50 = arith.constant 0 : index
    %84 = vector.load %arg16[%c0_49, %c0_50] : memref<1x32xf32, #tpu.memory_space<vmem>>, vector<1x32xf32>
    %c0_51 = arith.constant 0 : index
    %c0_52 = arith.constant 0 : index
    %85 = vector.load %arg17[%c0_51, %c0_52] : memref<1x32xf32, #tpu.memory_space<vmem>>, vector<1x32xf32>
    %cst_53 = arith.constant dense<0.000000e+00> : vector<8xf32>
    %86 = vector.multi_reduction <add>, %83, %cst_53 [1] : vector<8x32xf32> to vector<8xf32>
    %87 = vector.shape_cast %86 : vector<8xf32> to vector<8x1xf32>
    %cst_54 = arith.constant 3.200000e+01 : f32
    %88 = vector.broadcast %cst_54 : f32 to vector<8x1xf32>
    %89 = arith.divf %87, %88 : vector<8x1xf32>
    %90 = vector.broadcast %89 : vector<8x1xf32> to vector<8x32xf32>
    %91 = arith.subf %83, %90 : vector<8x32xf32>
    %92 = vector.broadcast %89 : vector<8x1xf32> to vector<8x32xf32>
    %93 = arith.subf %83, %92 : vector<8x32xf32>
    %94 = arith.mulf %91, %93 : vector<8x32xf32>
    %cst_55 = arith.constant dense<0.000000e+00> : vector<8xf32>
    %95 = vector.multi_reduction <add>, %94, %cst_55 [1] : vector<8x32xf32> to vector<8xf32>
    %96 = vector.shape_cast %95 : vector<8xf32> to vector<8x1xf32>
    %cst_56 = arith.constant 3.200000e+01 : f32
    %97 = vector.broadcast %cst_56 : f32 to vector<8x1xf32>
    %98 = arith.divf %96, %97 : vector<8x1xf32>
    %99 = vector.broadcast %89 : vector<8x1xf32> to vector<8x32xf32>
    %100 = arith.subf %83, %99 : vector<8x32xf32>
    %cst_57 = arith.constant 9.99999974E-6 : f32
    %101 = vector.broadcast %cst_57 : f32 to vector<8x1xf32>
    %102 = arith.addf %98, %101 : vector<8x1xf32>
    %103 = math.rsqrt %102 : vector<8x1xf32>
    %104 = vector.broadcast %103 : vector<8x1xf32> to vector<8x32xf32>
    %105 = arith.mulf %100, %104 : vector<8x32xf32>
    %106 = vector.broadcast %84 : vector<1x32xf32> to vector<8x32xf32>
    %107 = arith.mulf %105, %106 : vector<8x32xf32>
    %108 = vector.broadcast %85 : vector<1x32xf32> to vector<8x32xf32>
    %109 = arith.addf %107, %108 : vector<8x32xf32>
    %c0_58 = arith.constant 0 : index
    %c0_59 = arith.constant 0 : index
    %110 = vector.load %arg18[%c0_58, %c0_59] : memref<32x32xf32, #tpu.memory_space<vmem>>, vector<32x32xf32>
    %cst_60 = arith.constant dense<0.000000e+00> : vector<8x32xf32>
    %111 = tpu.matmul %109, %110, %cst_60 {dimension_numbers = #tpu.dot_dimension_numbers<[1], [0], [0], [1], [0, 0, 1, 1], [], []>} : vector<8x32xf32>, vector<32x32xf32>, vector<8x32xf32> -> vector<8x32xf32>
    %c0_61 = arith.constant 0 : index
    %c0_62 = arith.constant 0 : index
    %112 = vector.load %arg19[%c0_61, %c0_62] : memref<1x32xf32, #tpu.memory_space<vmem>>, vector<1x32xf32>
    %113 = vector.broadcast %112 : vector<1x32xf32> to vector<8x32xf32>
    %114 = arith.addf %111, %113 : vector<8x32xf32>
    %cst_63 = arith.constant 5.000000e-01 : f32
    %115 = vector.broadcast %cst_63 : f32 to vector<8x32xf32>
    %116 = arith.mulf %115, %114 : vector<8x32xf32>
    %cst_64 = arith.constant 4.471500e-02 : f32
    %117 = vector.broadcast %cst_64 : f32 to vector<8x32xf32>
    %118 = arith.mulf %117, %114 : vector<8x32xf32>
    %119 = arith.mulf %118, %114 : vector<8x32xf32>
    %120 = arith.mulf %119, %114 : vector<8x32xf32>
    %121 = arith.addf %114, %120 : vector<8x32xf32>
    %cst_65 = arith.constant 0.797884583 : f32
    %122 = vector.broadcast %cst_65 : f32 to vector<8x32xf32>
    %123 = arith.mulf %122, %121 : vector<8x32xf32>
    %124 = math.tanh %123 : vector<8x32xf32>
    %cst_66 = arith.constant 1.000000e+00 : f32
    %125 = vector.broadcast %cst_66 : f32 to vector<8x32xf32>
    %126 = arith.addf %125, %124 : vector<8x32xf32>
    %127 = arith.mulf %116, %126 : vector<8x32xf32>
    %c0_67 = arith.constant 0 : index
    %c0_68 = arith.constant 0 : index
    %128 = vector.load %arg20[%c0_67, %c0_68] : memref<32x32xf32, #tpu.memory_space<vmem>>, vector<32x32xf32>
    %cst_69 = arith.constant dense<0.000000e+00> : vector<8x32xf32>
    %129 = tpu.matmul %127, %128, %cst_69 {dimension_numbers = #tpu.dot_dimension_numbers<[1], [0], [0], [1], [0, 0, 1, 1], [], []>} : vector<8x32xf32>, vector<32x32xf32>, vector<8x32xf32> -> vector<8x32xf32>
    %c0_70 = arith.constant 0 : index
    %c0_71 = arith.constant 0 : index
    %130 = vector.load %arg21[%c0_70, %c0_71] : memref<1x32xf32, #tpu.memory_space<vmem>>, vector<1x32xf32>
    %131 = vector.broadcast %130 : vector<1x32xf32> to vector<8x32xf32>
    %132 = arith.addf %129, %131 : vector<8x32xf32>
    %133 = arith.addf %109, %132 : vector<8x32xf32>
    %c0_72 = arith.constant 0 : index
    %c0_73 = arith.constant 0 : index
    %134 = vector.load %arg22[%c0_72, %c0_73] : memref<1x32xf32, #tpu.memory_space<vmem>>, vector<1x32xf32>
    %c0_74 = arith.constant 0 : index
    %c0_75 = arith.constant 0 : index
    %135 = vector.load %arg23[%c0_74, %c0_75] : memref<1x32xf32, #tpu.memory_space<vmem>>, vector<1x32xf32>
    %cst_76 = arith.constant dense<0.000000e+00> : vector<8xf32>
    %136 = vector.multi_reduction <add>, %133, %cst_76 [1] : vector<8x32xf32> to vector<8xf32>
    %137 = vector.shape_cast %136 : vector<8xf32> to vector<8x1xf32>
    %cst_77 = arith.constant 3.200000e+01 : f32
    %138 = vector.broadcast %cst_77 : f32 to vector<8x1xf32>
    %139 = arith.divf %137, %138 : vector<8x1xf32>
    %140 = vector.broadcast %139 : vector<8x1xf32> to vector<8x32xf32>
    %141 = arith.subf %133, %140 : vector<8x32xf32>
    %142 = vector.broadcast %139 : vector<8x1xf32> to vector<8x32xf32>
    %143 = arith.subf %133, %142 : vector<8x32xf32>
    %144 = arith.mulf %141, %143 : vector<8x32xf32>
    %cst_78 = arith.constant dense<0.000000e+00> : vector<8xf32>
    %145 = vector.multi_reduction <add>, %144, %cst_78 [1] : vector<8x32xf32> to vector<8xf32>
    %146 = vector.shape_cast %145 : vector<8xf32> to vector<8x1xf32>
    %cst_79 = arith.constant 3.200000e+01 : f32
    %147 = vector.broadcast %cst_79 : f32 to vector<8x1xf32>
    %148 = arith.divf %146, %147 : vector<8x1xf32>
    %149 = vector.broadcast %139 : vector<8x1xf32> to vector<8x32xf32>
    %150 = arith.subf %133, %149 : vector<8x32xf32>
    %cst_80 = arith.constant 9.99999974E-6 : f32
    %151 = vector.broadcast %cst_80 : f32 to vector<8x1xf32>
    %152 = arith.addf %148, %151 : vector<8x1xf32>
    %153 = math.rsqrt %152 : vector<8x1xf32>
    %154 = vector.broadcast %153 : vector<8x1xf32> to vector<8x32xf32>
    %155 = arith.mulf %150, %154 : vector<8x32xf32>
    %156 = vector.broadcast %134 : vector<1x32xf32> to vector<8x32xf32>
    %157 = arith.mulf %155, %156 : vector<8x32xf32>
    %158 = vector.broadcast %135 : vector<1x32xf32> to vector<8x32xf32>
    %159 = arith.addf %157, %158 : vector<8x32xf32>
    %c0_81 = arith.constant 0 : index
    %c0_82 = arith.constant 0 : index
    %c0_83 = arith.constant 0 : index
    %160 = vector.load %arg24[%c0_81, %c0_82, %c0_83] : memref<1x8x32xf32, #tpu.memory_space<vmem>>, vector<1x8x32xf32>
    %161 = vector.shape_cast %160 : vector<1x8x32xf32> to vector<8x32xf32>
    %162 = vector.shape_cast %159 : vector<8x32xf32> to vector<1x8x32xf32>
    tpu.vector_store %arg24[%c0_81, %c0_82, %c0_83], %162 {strides = array<i32>} : memref<1x8x32xf32, #tpu.memory_space<vmem>>, vector<1x8x32xf32>,
    return
  }
  func.func @transform_0(%arg0: i32) -> (i32, i32, i32) {
    %c0_i32 = arith.constant 0 : i32
    %c0_i32_0 = arith.constant 0 : i32
    %c0_i32_1 = arith.constant 0 : i32
    return %arg0, %c0_i32, %c0_i32_0 : i32, i32, i32
  }
  func.func @transform_1(%arg0: i32) -> (i32, i32) {
    %c0_i32 = arith.constant 0 : i32
    %c0_i32_0 = arith.constant 0 : i32
    %c0_i32_1 = arith.constant 0 : i32
    return %c0_i32, %c0_i32_0 : i32, i32
  }
  func.func @transform_2(%arg0: i32) -> (i32, i32) {
    %c0_i32 = arith.constant 0 : i32
    %c0_i32_0 = arith.constant 0 : i32
    %c0_i32_1 = arith.constant 0 : i32
    return %c0_i32, %c0_i32_0 : i32, i32
  }
  func.func @transform_3(%arg0: i32) -> (i32, i32) {
    %c0_i32 = arith.constant 0 : i32
    %c0_i32_0 = arith.constant 0 : i32
    %c0_i32_1 = arith.constant 0 : i32
    return %c0_i32, %c0_i32_0 : i32, i32
  }
  func.func @transform_4(%arg0: i32) -> (i32, i32) {
    %c0_i32 = arith.constant 0 : i32
    %c0_i32_0 = arith.constant 0 : i32
    %c0_i32_1 = arith.constant 0 : i32
    return %c0_i32, %c0_i32_0 : i32, i32
  }
  func.func @transform_5(%arg0: i32) -> (i32, i32) {
    %c0_i32 = arith.constant 0 : i32
    %c0_i32_0 = arith.constant 0 : i32
    %c0_i32_1 = arith.constant 0 : i32
    return %c0_i32, %c0_i32_0 : i32, i32
  }
  func.func @transform_6(%arg0: i32) -> (i32, i32) {
    %c0_i32 = arith.constant 0 : i32
    %c0_i32_0 = arith.constant 0 : i32
    %c0_i32_1 = arith.constant 0 : i32
    return %c0_i32, %c0_i32_0 : i32, i32
  }
  func.func @transform_7(%arg0: i32) -> (i32, i32) {
    %c0_i32 = arith.constant 0 : i32
    %c0_i32_0 = arith.constant 0 : i32
    %c0_i32_1 = arith.constant 0 : i32
    return %c0_i32, %c0_i32_0 : i32, i32
  }
  func.func @transform_8(%arg0: i32) -> (i32, i32) {
    %c0_i32 = arith.constant 0 : i32
    %c0_i32_0 = arith.constant 0 : i32
    %c0_i32_1 = arith.constant 0 : i32
    return %c0_i32, %c0_i32_0 : i32, i32
  }
  func.func @transform_9(%arg0: i32) -> (i32, i32) {
    %c0_i32 = arith.constant 0 : i32
    %c0_i32_0 = arith.constant 0 : i32
    %c0_i32_1 = arith.constant 0 : i32
    return %c0_i32, %c0_i32_0 : i32, i32
  }
  func.func @transform_10(%arg0: i32) -> (i32, i32) {
    %c0_i32 = arith.constant 0 : i32
    %c0_i32_0 = arith.constant 0 : i32
    %c0_i32_1 = arith.constant 0 : i32
    return %c0_i32, %c0_i32_0 : i32, i32
  }
  func.func @transform_11(%arg0: i32) -> (i32, i32) {
    %c0_i32 = arith.constant 0 : i32
    %c0_i32_0 = arith.constant 0 : i32
    %c0_i32_1 = arith.constant 0 : i32
    return %c0_i32, %c0_i32_0 : i32, i32
  }
  func.func @transform_12(%arg0: i32) -> (i32, i32) {
    %c0_i32 = arith.constant 0 : i32
    %c0_i32_0 = arith.constant 0 : i32
    %c0_i32_1 = arith.constant 0 : i32
    return %c0_i32, %c0_i32_0 : i32, i32
  }
  func.func @transform_13(%arg0: i32) -> (i32, i32) {
    %c0_i32 = arith.constant 0 : i32
    %c0_i32_0 = arith.constant 0 : i32
    %c0_i32_1 = arith.constant 0 : i32
    return %c0_i32, %c0_i32_0 : i32, i32
  }
  func.func @transform_14(%arg0: i32) -> (i32, i32) {
    %c0_i32 = arith.constant 0 : i32
    %c0_i32_0 = arith.constant 0 : i32
    %c0_i32_1 = arith.constant 0 : i32
    return %c0_i32, %c0_i32_0 : i32, i32
  }
  func.func @transform_15(%arg0: i32) -> (i32, i32) {
    %c0_i32 = arith.constant 0 : i32
    %c0_i32_0 = arith.constant 0 : i32
    %c0_i32_1 = arith.constant 0 : i32
    return %c0_i32, %c0_i32_0 : i32, i32
  }
  func.func @transform_16(%arg0: i32) -> (i32, i32) {
    %c0_i32 = arith.constant 0 : i32
    %c0_i32_0 = arith.constant 0 : i32
    %c0_i32_1 = arith.constant 0 : i32
    return %c0_i32, %c0_i32_0 : i32, i32
  }
  func.func @transform_17(%arg0: i32) -> (i32, i32) {
    %c0_i32 = arith.constant 0 : i32
    %c0_i32_0 = arith.constant 0 : i32
    %c0_i32_1 = arith.constant 0 : i32
    return %c0_i32, %c0_i32_0 : i32, i32
  }
  func.func @transform_18(%arg0: i32) -> (i32, i32) {
    %c0_i32 = arith.constant 0 : i32
    %c0_i32_0 = arith.constant 0 : i32
    %c0_i32_1 = arith.constant 0 : i32
    return %c0_i32, %c0_i32_0 : i32, i32
  }
  func.func @transform_19(%arg0: i32) -> (i32, i32) {
    %c0_i32 = arith.constant 0 : i32
    %c0_i32_0 = arith.constant 0 : i32
    %c0_i32_1 = arith.constant 0 : i32
    return %c0_i32, %c0_i32_0 : i32, i32
  }
  func.func @transform_20(%arg0: i32) -> (i32, i32) {
    %c0_i32 = arith.constant 0 : i32
    %c0_i32_0 = arith.constant 0 : i32
    %c0_i32_1 = arith.constant 0 : i32
    return %c0_i32, %c0_i32_0 : i32, i32
  }
  func.func @transform_21(%arg0: i32) -> (i32, i32) {
    %c0_i32 = arith.constant 0 : i32
    %c0_i32_0 = arith.constant 0 : i32
    %c0_i32_1 = arith.constant 0 : i32
    return %c0_i32, %c0_i32_0 : i32, i32
  }
  func.func @transform_22(%arg0: i32) -> (i32, i32) {
    %c0_i32 = arith.constant 0 : i32
    %c0_i32_0 = arith.constant 0 : i32
    %c0_i32_1 = arith.constant 0 : i32
    return %c0_i32, %c0_i32_0 : i32, i32
  }
  func.func @transform_23(%arg0: i32) -> (i32, i32, i32) {
    %c0_i32 = arith.constant 0 : i32
    %c0_i32_0 = arith.constant 0 : i32
    %c0_i32_1 = arith.constant 0 : i32
    return %arg0, %c0_i32, %c0_i32_0 : i32, i32, i32
  }
}

</mosaic_0001>

<llo_original>
// kernel: tpu_custom_call.1
$region0: #{tpu_custom_call.1}
  #allocation0 [shape = 'u32[]', space=smem, size = 0x4, offset = 0x4, fixed_abs, tag = 'smem constant byte address 0x4 - core index']
  #allocation1 [shape = 'u32[144,128]{1,0:T(1,128)}', space=vmem, size = 0x12000, scoped, tag = 'internal scratch']
  %s0 = inlined_call_operand.hbm [shape: f32[2,8,32], index: 0, kind: input, shape index: {}]
  %s1 = inlined_call_operand.hbm [shape: f32[8,8], index: 1, kind: input, shape index: {}]
  %s2 = inlined_call_operand.hbm [shape: f32[8,16], index: 2, kind: input, shape index: {}]
  %s3 = inlined_call_operand.hbm [shape: f32[8,16], index: 3, kind: input, shape index: {}]
  %s4 = inlined_call_operand.hbm [shape: f32[8,16], index: 4, kind: input, shape index: {}]
  %s5 = inlined_call_operand.vmem [shape: f32[32,16], index: 5, kind: input, shape index: {}]
  %s6 = inlined_call_operand.hbm [shape: f32[1,16], index: 6, kind: input, shape index: {}]
  %s7 = inlined_call_operand.vmem [shape: f32[32,32], index: 7, kind: input, shape index: {}]
  %s8 = inlined_call_operand.hbm [shape: f32[1,32], index: 8, kind: input, shape index: {}]
  %s9 = inlined_call_operand.vmem [shape: f32[32,32], index: 9, kind: input, shape index: {}]
  %s10 = inlined_call_operand.vmem [shape: f32[1,32], index: 10, kind: input, shape index: {}]
  %s11 = inlined_call_operand.hbm [shape: f32[32,32], index: 11, kind: input, shape index: {}]
  %s12 = inlined_call_operand.vmem [shape: f32[1,32], index: 12, kind: input, shape index: {}]
  %s13 = inlined_call_operand.hbm [shape: f32[32,32], index: 13, kind: input, shape index: {}]
  %s14 = inlined_call_operand.vmem [shape: f32[1,32], index: 14, kind: input, shape index: {}]
  %s15 = inlined_call_operand.vmem [shape: f32[1,32], index: 15, kind: input, shape index: {}]
  %s16 = inlined_call_operand.vmem [shape: f32[1,32], index: 16, kind: input, shape index: {}]
  %s17 = inlined_call_operand.hbm [shape: f32[32,32], index: 17, kind: input, shape index: {}]
  %s18 = inlined_call_operand.vmem [shape: f32[1,32], index: 18, kind: input, shape index: {}]
  %s19 = inlined_call_operand.hbm [shape: f32[32,32], index: 19, kind: input, shape index: {}]
  %s20 = inlined_call_operand.vmem [shape: f32[1,32], index: 20, kind: input, shape index: {}]
  %s21 = inlined_call_operand.vmem [shape: f32[1,32], index: 21, kind: input, shape index: {}]
  %s22 = inlined_call_operand.vmem [shape: f32[1,32], index: 22, kind: input, shape index: {}]
  %s23 = inlined_call_operand.hbm [shape: f32[2,8,32], index: 23, kind: output, shape index: {}]
  %s24 = sld [smem:[#allocation0]]
  $region169: #{tpu_custom_call.1} parent=0
    _
  %s26 = ssub.s32 1, %s24
  %s27 = scalar_select 0, %s26, %s24
  $region1: #{tpu_custom_call.1} parent=0
    #allocation2 [shape = 'u8[8192]{0}', space=vmem, size = 0x2000, scoped, tag = 'input window, operand 0']
    #allocation3 [shape = 's32[2]{0}', space=sflag, size = 0x8, scoped, tag = 'scoped memory for tpu_custom_call.1']
    #allocation4 [shape = 's32[2]{0}', space=sflag, size = 0x8, scoped, tag = 'scoped memory for tpu_custom_call.1']
    #allocation5 [shape = 'u8[4096]{0}', space=vmem, size = 0x1000, scoped, tag = 'input window, operand 1, single buffered']
    #allocation6 [shape = 's32[1]{0}', space=sflag, size = 0x4, scoped, tag = 'scoped memory for tpu_custom_call.1']
    #allocation7 [shape = 'u8[4096]{0}', space=vmem, size = 0x1000, scoped, tag = 'input window, operand 2, single buffered']
    #allocation8 [shape = 'u8[4096]{0}', space=vmem, size = 0x1000, scoped, tag = 'input window, operand 3, single buffered']
    #allocation9 [shape = 's32[1]{0}', space=sflag, size = 0x4, scoped, tag = 'scoped memory for tpu_custom_call.1']
    #allocation10 [shape = 'u8[4096]{0}', space=vmem, size = 0x1000, scoped, tag = 'input window, operand 4, single buffered']
    #allocation11 [shape = 'u8[512]{0}', space=vmem, size = 0x400, scoped, tag = 'input window, operand 6, single buffered']
    #allocation12 [shape = 's32[1]{0}', space=sflag, size = 0x4, scoped, tag = 'scoped memory for tpu_custom_call.1']
    #allocation13 [shape = 'u8[512]{0}', space=vmem, size = 0x400, scoped, tag = 'input window, operand 8, single buffered']
    #allocation14 [shape = 'u8[16384]{0}', space=vmem, size = 0x4000, scoped, tag = 'input window, operand 11, single buffered']
    #allocation15 [shape = 's32[1]{0}', space=sflag, size = 0x4, scoped, tag = 'scoped memory for tpu_custom_call.1']
    #allocation16 [shape = 'u8[16384]{0}', space=vmem, size = 0x4000, scoped, tag = 'input window, operand 13, single buffered']
    #allocation17 [shape = 'u8[16384]{0}', space=vmem, size = 0x4000, scoped, tag = 'input window, operand 17, single buffered']
    #allocation18 [shape = 's32[1]{0}', space=sflag, size = 0x4, scoped, tag = 'scoped memory for tpu_custom_call.1']
    #allocation19 [shape = 'u8[16384]{0}', space=vmem, size = 0x4000, scoped, tag = 'input window, operand 19, single buffered']
    #allocation20 [shape = 'u8[8192]{0}', space=vmem, size = 0x2000, scoped, tag = 'output window, operand 0']
    %28 = vsyncpa [#allocation3], 0
    %s29 = scalar_lea.sflag [#allocation3], 1
    %30 = vsyncpa %s29, 0
    %31 = vsyncpa [#allocation6], 0
    %32 = vsyncpa [#allocation9], 0
    %33 = vsyncpa [#allocation12], 0
    %34 = vsyncpa [#allocation15], 0
    %35 = vsyncpa [#allocation18], 0
    %36 = vsyncpa [#allocation4], 0
    %s37 = scalar_lea.sflag [#allocation4], 1
    %38 = vsyncpa %s37, 0
    loop: start=0, step=1, limit=4
    $region2: #{tpu_custom_call.1} parent=1 // loop_pre_header
      _
    $region3: #{tpu_custom_call.1} parent=1 // loop_header
      %s40 = sphi 0, %s44
      %p41 = scmp.ge.s32.totalorder %s40, 4
      %s50 = sphi 0, %s52
      %s53 = sphi 0, %s50
      %s54 = sphi 0, %s53
      %s70 = sphi 0, %s54
      %s74 = sphi 0, %s74
      %s76 = sphi 0, %s74
      %s77 = sphi 0, %s76
      %s91 = sphi 0, %s77
      %s95 = sphi 0, %s95
      %s97 = sphi 0, %s95
      %s98 = sphi 0, %s97
      %s112 = sphi 0, %s98
      %s116 = sphi 0, %s116
      %s118 = sphi 0, %s116
      %s119 = sphi 0, %s118
      %s133 = sphi 0, %s119
      %s137 = sphi 0, %s137
      %s139 = sphi 0, %s137
      %s140 = sphi 0, %s139
      %s154 = sphi 0, %s140
      %s158 = sphi 0, %s158
      %s160 = sphi 0, %s158
      %s161 = sphi 0, %s160
      %s175 = sphi 0, %s161
      %s179 = sphi 0, %s179
      %s181 = sphi 0, %s179
      %s182 = sphi 0, %s181
      %s196 = sphi 0, %s182
      %s200 = sphi 0, %s200
      %s202 = sphi 0, %s200
      %s203 = sphi 0, %s202
      %s217 = sphi 0, %s203
      %s221 = sphi 0, %s221
      %s223 = sphi 0, %s221
      %s224 = sphi 0, %s223
      %s238 = sphi 0, %s224
      %s242 = sphi 0, %s242
      %s244 = sphi 0, %s242
      %s245 = sphi 0, %s244
      %s259 = sphi 0, %s245
      %s263 = sphi 0, %s263
      %s265 = sphi 0, %s263
      %s266 = sphi 0, %s265
      %s280 = sphi 0, %s266
      %s284 = sphi 0, %s284
      %s286 = sphi 0, %s284
      %s287 = sphi 0, %s286
      %s301 = sphi 0, %s287
      %s305 = sphi 0, %s305
      %s307 = sphi 0, %s305
      %s308 = sphi 0, %s307
      %s322 = sphi 0, %s308
      %s326 = sphi 0, %s326
      %s328 = sphi 0, %s326
      %s329 = sphi 0, %s328
      %s343 = sphi 0, %s329
      %s347 = sphi 0, %s347
      %s349 = sphi 0, %s347
      %s350 = sphi 0, %s349
      %s364 = sphi 0, %s350
      %s368 = sphi 0, %s368
      %s370 = sphi 0, %s368
      %s371 = sphi 0, %s370
      %s385 = sphi 0, %s371
      %s389 = sphi 0, %s389
      %s391 = sphi 0, %s389
      %s392 = sphi 0, %s391
      %s406 = sphi 0, %s392
      %s410 = sphi 0, %s410
      %s412 = sphi 0, %s410
      %s413 = sphi 0, %s412
      %s427 = sphi 0, %s413
      %s431 = sphi 0, %s431
      %s433 = sphi 0, %s431
      %s434 = sphi 0, %s433
      %s448 = sphi 0, %s434
      %s452 = sphi 0, %s452
      %s454 = sphi 0, %s452
      %s455 = sphi 0, %s454
      %s469 = sphi 0, %s455
      %s473 = sphi 0, %s473
      %s475 = sphi 0, %s473
      %s476 = sphi 0, %s475
      %s490 = sphi 0, %s476
      %s494 = sphi 0, %s494
      %s496 = sphi 0, %s494
      %s497 = sphi 0, %s496
      %s511 = sphi 0, %s497
      %s515 = sphi 0, %s515
      %s517 = sphi 0, %s515
      %s518 = sphi 0, %s517
      %s532 = sphi 0, %s518
      %s538 = sphi 0, %s540
      %s541 = sphi 0, %s538
      %s542 = sphi 0, %s541
      %s558 = sphi 0, %s542
    $region4: #{tpu_custom_call.1} parent=1 // loop_header_branch
      %43 = sbr.rel (%p41) target = $region8
    $region5: #{tpu_custom_call.1} parent=1 // loop_body
      %s45 = ssub.s32 %s40, 1
      %s46 = ssub.s32 %s40, 2
      %s47 = sadd.s32 %s40, 1
      %s48 = ssub.s32 %s40, %s47
      %p49 = scmp.eq.s32.totalorder %s48, 0
      %s51 = sadd.s32 %s50, 1
      %s52 = scalar_select %p49, %s50, %s51
      %p55 = pneg %p49
      %p56 = scmp.eq.s32.totalorder %s40, 1
      %p57 = por %p55, %p56
      %p58 = scmp.ne.s32.totalorder %s50, %s53
      %p59 = scmp.eq.s32.totalorder %s40, 0
      %p60 = por %p58, %p59
      %p61 = scmp.ne.s32.totalorder %s50, %s53
      %p62 = scmp.eq.s32.totalorder %s45, 1
      %p63 = por %p61, %p62
      %p64 = scmp.ne.s32.totalorder %s53, %s54
      %p65 = scmp.eq.s32.totalorder %s45, 0
      %p66 = por %p64, %p65
      %p67 = scmp.ne.s32.totalorder %s53, %s54
      %p68 = scmp.eq.s32.totalorder %s46, 1
      %p69 = por %p67, %p68
      %p71 = scmp.ne.s32.totalorder %s54, %s70
      %p72 = scmp.eq.s32.totalorder %s46, 0
      %p73 = por %p71, %p72
      %s75 = sadd.s32 %s74, 1
      %p78 = scmp.eq.s32.totalorder %s40, 1
      %p79 = scmp.ne.s32.totalorder %s74, %s76
      %p80 = scmp.eq.s32.totalorder %s40, 0
      %p81 = por %p79, %p80
      %p82 = scmp.ne.s32.totalorder %s74, %s76
      %p83 = scmp.eq.s32.totalorder %s45, 1
      %p84 = por %p82, %p83
      %p85 = scmp.ne.s32.totalorder %s76, %s77
      %p86 = scmp.eq.s32.totalorder %s45, 0
      %p87 = por %p85, %p86
      %p88 = scmp.ne.s32.totalorder %s76, %s77
      %p89 = scmp.eq.s32.totalorder %s46, 1
      %p90 = por %p88, %p89
      %p92 = scmp.ne.s32.totalorder %s77, %s91
      %p93 = scmp.eq.s32.totalorder %s46, 0
      %p94 = por %p92, %p93
      %s96 = sadd.s32 %s95, 1
      %p99 = scmp.eq.s32.totalorder %s40, 1
      %p100 = scmp.ne.s32.totalorder %s95, %s97
      %p101 = scmp.eq.s32.totalorder %s40, 0
      %p102 = por %p100, %p101
      %p103 = scmp.ne.s32.totalorder %s95, %s97
      %p104 = scmp.eq.s32.totalorder %s45, 1
      %p105 = por %p103, %p104
      %p106 = scmp.ne.s32.totalorder %s97, %s98
      %p107 = scmp.eq.s32.totalorder %s45, 0
      %p108 = por %p106, %p107
      %p109 = scmp.ne.s32.totalorder %s97, %s98
      %p110 = scmp.eq.s32.totalorder %s46, 1
      %p111 = por %p109, %p110
      %p113 = scmp.ne.s32.totalorder %s98, %s112
      %p114 = scmp.eq.s32.totalorder %s46, 0
      %p115 = por %p113, %p114
      %s117 = sadd.s32 %s116, 1
      %p120 = scmp.eq.s32.totalorder %s40, 1
      %p121 = scmp.ne.s32.totalorder %s116, %s118
      %p122 = scmp.eq.s32.totalorder %s40, 0
      %p123 = por %p121, %p122
      %p124 = scmp.ne.s32.totalorder %s116, %s118
      %p125 = scmp.eq.s32.totalorder %s45, 1
      %p126 = por %p124, %p125
      %p127 = scmp.ne.s32.totalorder %s118, %s119
      %p128 = scmp.eq.s32.totalorder %s45, 0
      %p129 = por %p127, %p128
      %p130 = scmp.ne.s32.totalorder %s118, %s119
      %p131 = scmp.eq.s32.totalorder %s46, 1
      %p132 = por %p130, %p131
      %p134 = scmp.ne.s32.totalorder %s119, %s133
      %p135 = scmp.eq.s32.totalorder %s46, 0
      %p136 = por %p134, %p135
      %s138 = sadd.s32 %s137, 1
      %p141 = scmp.eq.s32.totalorder %s40, 1
      %p142 = scmp.ne.s32.totalorder %s137, %s139
      %p143 = scmp.eq.s32.totalorder %s40, 0
      %p144 = por %p142, %p143
      %p145 = scmp.ne.s32.totalorder %s137, %s139
      %p146 = scmp.eq.s32.totalorder %s45, 1
      %p147 = por %p145, %p146
      %p148 = scmp.ne.s32.totalorder %s139, %s140
      %p149 = scmp.eq.s32.totalorder %s45, 0
      %p150 = por %p148, %p149
      %p151 = scmp.ne.s32.totalorder %s139, %s140
      %p152 = scmp.eq.s32.totalorder %s46, 1
      %p153 = por %p151, %p152
      %p155 = scmp.ne.s32.totalorder %s140, %s154
      %p156 = scmp.eq.s32.totalorder %s46, 0
      %p157 = por %p155, %p156
      %s159 = sadd.s32 %s158, 1
      %p162 = scmp.eq.s32.totalorder %s40, 1
      %p163 = scmp.ne.s32.totalorder %s158, %s160
      %p164 = scmp.eq.s32.totalorder %s40, 0
      %p165 = por %p163, %p164
      %p166 = scmp.ne.s32.totalorder %s158, %s160
      %p167 = scmp.eq.s32.totalorder %s45, 1
      %p168 = por %p166, %p167
      %p169 = scmp.ne.s32.totalorder %s160, %s161
      %p170 = scmp.eq.s32.totalorder %s45, 0
      %p171 = por %p169, %p170
      %p172 = scmp.ne.s32.totalorder %s160, %s161
      %p173 = scmp.eq.s32.totalorder %s46, 1
      %p174 = por %p172, %p173
      %p176 = scmp.ne.s32.totalorder %s161, %s175
      %p177 = scmp.eq.s32.totalorder %s46, 0
      %p178 = por %p176, %p177
      %s180 = sadd.s32 %s179, 1
      %p183 = scmp.eq.s32.totalorder %s40, 1
      %p184 = scmp.ne.s32.totalorder %s179, %s181
      %p185 = scmp.eq.s32.totalorder %s40, 0
      %p186 = por %p184, %p185
      %p187 = scmp.ne.s32.totalorder %s179, %s181
      %p188 = scmp.eq.s32.totalorder %s45, 1
      %p189 = por %p187, %p188
      %p190 = scmp.ne.s32.totalorder %s181, %s182
      %p191 = scmp.eq.s32.totalorder %s45, 0
      %p192 = por %p190, %p191
      %p193 = scmp.ne.s32.totalorder %s181, %s182
      %p194 = scmp.eq.s32.totalorder %s46, 1
      %p195 = por %p193, %p194
      %p197 = scmp.ne.s32.totalorder %s182, %s196
      %p198 = scmp.eq.s32.totalorder %s46, 0
      %p199 = por %p197, %p198
      %s201 = sadd.s32 %s200, 1
      %p204 = scmp.eq.s32.totalorder %s40, 1
      %p205 = scmp.ne.s32.totalorder %s200, %s202
      %p206 = scmp.eq.s32.totalorder %s40, 0
      %p207 = por %p205, %p206
      %p208 = scmp.ne.s32.totalorder %s200, %s202
      %p209 = scmp.eq.s32.totalorder %s45, 1
      %p210 = por %p208, %p209
      %p211 = scmp.ne.s32.totalorder %s202, %s203
      %p212 = scmp.eq.s32.totalorder %s45, 0
      %p213 = por %p211, %p212
      %p214 = scmp.ne.s32.totalorder %s202, %s203
      %p215 = scmp.eq.s32.totalorder %s46, 1
      %p216 = por %p214, %p215
      %p218 = scmp.ne.s32.totalorder %s203, %s217
      %p219 = scmp.eq.s32.totalorder %s46, 0
      %p220 = por %p218, %p219
      %s222 = sadd.s32 %s221, 1
      %p225 = scmp.eq.s32.totalorder %s40, 1
      %p226 = scmp.ne.s32.totalorder %s221, %s223
      %p227 = scmp.eq.s32.totalorder %s40, 0
      %p228 = por %p226, %p227
      %p229 = scmp.ne.s32.totalorder %s221, %s223
      %p230 = scmp.eq.s32.totalorder %s45, 1
      %p231 = por %p229, %p230
      %p232 = scmp.ne.s32.totalorder %s223, %s224
      %p233 = scmp.eq.s32.totalorder %s45, 0
      %p234 = por %p232, %p233
      %p235 = scmp.ne.s32.totalorder %s223, %s224
      %p236 = scmp.eq.s32.totalorder %s46, 1
      %p237 = por %p235, %p236
      %p239 = scmp.ne.s32.totalorder %s224, %s238
      %p240 = scmp.eq.s32.totalorder %s46, 0
      %p241 = por %p239, %p240
      %s243 = sadd.s32 %s242, 1
      %p246 = scmp.eq.s32.totalorder %s40, 1
      %p247 = scmp.ne.s32.totalorder %s242, %s244
      %p248 = scmp.eq.s32.totalorder %s40, 0
      %p249 = por %p247, %p248
      %p250 = scmp.ne.s32.totalorder %s242, %s244
      %p251 = scmp.eq.s32.totalorder %s45, 1
      %p252 = por %p250, %p251
      %p253 = scmp.ne.s32.totalorder %s244, %s245
      %p254 = scmp.eq.s32.totalorder %s45, 0
      %p255 = por %p253, %p254
      %p256 = scmp.ne.s32.totalorder %s244, %s245
      %p257 = scmp.eq.s32.totalorder %s46, 1
      %p258 = por %p256, %p257
      %p260 = scmp.ne.s32.totalorder %s245, %s259
      %p261 = scmp.eq.s32.totalorder %s46, 0
      %p262 = por %p260, %p261
      %s264 = sadd.s32 %s263, 1
      %p267 = scmp.eq.s32.totalorder %s40, 1
      %p268 = scmp.ne.s32.totalorder %s263, %s265
      %p269 = scmp.eq.s32.totalorder %s40, 0
      %p270 = por %p268, %p269
      %p271 = scmp.ne.s32.totalorder %s263, %s265
      %p272 = scmp.eq.s32.totalorder %s45, 1
      %p273 = por %p271, %p272
      %p274 = scmp.ne.s32.totalorder %s265, %s266
      %p275 = scmp.eq.s32.totalorder %s45, 0
      %p276 = por %p274, %p275
      %p277 = scmp.ne.s32.totalorder %s265, %s266
      %p278 = scmp.eq.s32.totalorder %s46, 1
      %p279 = por %p277, %p278
      %p281 = scmp.ne.s32.totalorder %s266, %s280
      %p282 = scmp.eq.s32.totalorder %s46, 0
      %p283 = por %p281, %p282
      %s285 = sadd.s32 %s284, 1
      %p288 = scmp.eq.s32.totalorder %s40, 1
      %p289 = scmp.ne.s32.totalorder %s284, %s286
      %p290 = scmp.eq.s32.totalorder %s40, 0
      %p291 = por %p289, %p290
      %p292 = scmp.ne.s32.totalorder %s284, %s286
      %p293 = scmp.eq.s32.totalorder %s45, 1
      %p294 = por %p292, %p293
      %p295 = scmp.ne.s32.totalorder %s286, %s287
      %p296 = scmp.eq.s32.totalorder %s45, 0
      %p297 = por %p295, %p296
      %p298 = scmp.ne.s32.totalorder %s286, %s287
      %p299 = scmp.eq.s32.totalorder %s46, 1
      %p300 = por %p298, %p299
      %p302 = scmp.ne.s32.totalorder %s287, %s301
      %p303 = scmp.eq.s32.totalorder %s46, 0
      %p304 = por %p302, %p303
      %s306 = sadd.s32 %s305, 1
      %p309 = scmp.eq.s32.totalorder %s40, 1
      %p310 = scmp.ne.s32.totalorder %s305, %s307
      %p311 = scmp.eq.s32.totalorder %s40, 0
      %p312 = por %p310, %p311
      %p313 = scmp.ne.s32.totalorder %s305, %s307
      %p314 = scmp.eq.s32.totalorder %s45, 1
      %p315 = por %p313, %p314
      %p316 = scmp.ne.s32.totalorder %s307, %s308
      %p317 = scmp.eq.s32.totalorder %s45, 0
      %p318 = por %p316, %p317
      %p319 = scmp.ne.s32.totalorder %s307, %s308
      %p320 = scmp.eq.s32.totalorder %s46, 1
      %p321 = por %p319, %p320
      %p323 = scmp.ne.s32.totalorder %s308, %s322
      %p324 = scmp.eq.s32.totalorder %s46, 0
      %p325 = por %p323, %p324
      %s327 = sadd.s32 %s326, 1
      %p330 = scmp.eq.s32.totalorder %s40, 1
      %p331 = scmp.ne.s32.totalorder %s326, %s328
      %p332 = scmp.eq.s32.totalorder %s40, 0
      %p333 = por %p331, %p332
      %p334 = scmp.ne.s32.totalorder %s326, %s328
      %p335 = scmp.eq.s32.totalorder %s45, 1
      %p336 = por %p334, %p335
      %p337 = scmp.ne.s32.totalorder %s328, %s329
      %p338 = scmp.eq.s32.totalorder %s45, 0
      %p339 = por %p337, %p338
      %p340 = scmp.ne.s32.totalorder %s328, %s329
      %p341 = scmp.eq.s32.totalorder %s46, 1
      %p342 = por %p340, %p341
      %p344 = scmp.ne.s32.totalorder %s329, %s343
      %p345 = scmp.eq.s32.totalorder %s46, 0
      %p346 = por %p344, %p345
      %s348 = sadd.s32 %s347, 1
      %p351 = scmp.eq.s32.totalorder %s40, 1
      %p352 = scmp.ne.s32.totalorder %s347, %s349
      %p353 = scmp.eq.s32.totalorder %s40, 0
      %p354 = por %p352, %p353
      %p355 = scmp.ne.s32.totalorder %s347, %s349
      %p356 = scmp.eq.s32.totalorder %s45, 1
      %p357 = por %p355, %p356
      %p358 = scmp.ne.s32.totalorder %s349, %s350
      %p359 = scmp.eq.s32.totalorder %s45, 0
      %p360 = por %p358, %p359
      %p361 = scmp.ne.s32.totalorder %s349, %s350
      %p362 = scmp.eq.s32.totalorder %s46, 1
      %p363 = por %p361, %p362
      %p365 = scmp.ne.s32.totalorder %s350, %s364
      %p366 = scmp.eq.s32.totalorder %s46, 0
      %p367 = por %p365, %p366
      %s369 = sadd.s32 %s368, 1
      %p372 = scmp.eq.s32.totalorder %s40, 1
      %p373 = scmp.ne.s32.totalorder %s368, %s370
      %p374 = scmp.eq.s32.totalorder %s40, 0
      %p375 = por %p373, %p374
      %p376 = scmp.ne.s32.totalorder %s368, %s370
      %p377 = scmp.eq.s32.totalorder %s45, 1
      %p378 = por %p376, %p377
      %p379 = scmp.ne.s32.totalorder %s370, %s371
      %p380 = scmp.eq.s32.totalorder %s45, 0
      %p381 = por %p379, %p380
      %p382 = scmp.ne.s32.totalorder %s370, %s371
      %p383 = scmp.eq.s32.totalorder %s46, 1
      %p384 = por %p382, %p383
      %p386 = scmp.ne.s32.totalorder %s371, %s385
      %p387 = scmp.eq.s32.totalorder %s46, 0
      %p388 = por %p386, %p387
      %s390 = sadd.s32 %s389, 1
      %p393 = scmp.eq.s32.totalorder %s40, 1
      %p394 = scmp.ne.s32.totalorder %s389, %s391
      %p395 = scmp.eq.s32.totalorder %s40, 0
      %p396 = por %p394, %p395
      %p397 = scmp.ne.s32.totalorder %s389, %s391
      %p398 = scmp.eq.s32.totalorder %s45, 1
      %p399 = por %p397, %p398
      %p400 = scmp.ne.s32.totalorder %s391, %s392
      %p401 = scmp.eq.s32.totalorder %s45, 0
      %p402 = por %p400, %p401
      %p403 = scmp.ne.s32.totalorder %s391, %s392
      %p404 = scmp.eq.s32.totalorder %s46, 1
      %p405 = por %p403, %p404
      %p407 = scmp.ne.s32.totalorder %s392, %s406
      %p408 = scmp.eq.s32.totalorder %s46, 0
      %p409 = por %p407, %p408
      %s411 = sadd.s32 %s410, 1
      %p414 = scmp.eq.s32.totalorder %s40, 1
      %p415 = scmp.ne.s32.totalorder %s410, %s412
      %p416 = scmp.eq.s32.totalorder %s40, 0
      %p417 = por %p415, %p416
      %p418 = scmp.ne.s32.totalorder %s410, %s412
      %p419 = scmp.eq.s32.totalorder %s45, 1
      %p420 = por %p418, %p419
      %p421 = scmp.ne.s32.totalorder %s412, %s413
      %p422 = scmp.eq.s32.totalorder %s45, 0
      %p423 = por %p421, %p422
      %p424 = scmp.ne.s32.totalorder %s412, %s413
      %p425 = scmp.eq.s32.totalorder %s46, 1
      %p426 = por %p424, %p425
      %p428 = scmp.ne.s32.totalorder %s413, %s427
      %p429 = scmp.eq.s32.totalorder %s46, 0
      %p430 = por %p428, %p429
      %s432 = sadd.s32 %s431, 1
      %p435 = scmp.eq.s32.totalorder %s40, 1
      %p436 = scmp.ne.s32.totalorder %s431, %s433
      %p437 = scmp.eq.s32.totalorder %s40, 0
      %p438 = por %p436, %p437
      %p439 = scmp.ne.s32.totalorder %s431, %s433
      %p440 = scmp.eq.s32.totalorder %s45, 1
      %p441 = por %p439, %p440
      %p442 = scmp.ne.s32.totalorder %s433, %s434
      %p443 = scmp.eq.s32.totalorder %s45, 0
      %p444 = por %p442, %p443
      %p445 = scmp.ne.s32.totalorder %s433, %s434
      %p446 = scmp.eq.s32.totalorder %s46, 1
      %p447 = por %p445, %p446
      %p449 = scmp.ne.s32.totalorder %s434, %s448
      %p450 = scmp.eq.s32.totalorder %s46, 0
      %p451 = por %p449, %p450
      %s453 = sadd.s32 %s452, 1
      %p456 = scmp.eq.s32.totalorder %s40, 1
      %p457 = scmp.ne.s32.totalorder %s452, %s454
      %p458 = scmp.eq.s32.totalorder %s40, 0
      %p459 = por %p457, %p458
      %p460 = scmp.ne.s32.totalorder %s452, %s454
      %p461 = scmp.eq.s32.totalorder %s45, 1
      %p462 = por %p460, %p461
      %p463 = scmp.ne.s32.totalorder %s454, %s455
      %p464 = scmp.eq.s32.totalorder %s45, 0
      %p465 = por %p463, %p464
      %p466 = scmp.ne.s32.totalorder %s454, %s455
      %p467 = scmp.eq.s32.totalorder %s46, 1
      %p468 = por %p466, %p467
      %p470 = scmp.ne.s32.totalorder %s455, %s469
      %p471 = scmp.eq.s32.totalorder %s46, 0
      %p472 = por %p470, %p471
      %s474 = sadd.s32 %s473, 1
      %p477 = scmp.eq.s32.totalorder %s40, 1
      %p478 = scmp.ne.s32.totalorder %s473, %s475
      %p479 = scmp.eq.s32.totalorder %s40, 0
      %p480 = por %p478, %p479
      %p481 = scmp.ne.s32.totalorder %s473, %s475
      %p482 = scmp.eq.s32.totalorder %s45, 1
      %p483 = por %p481, %p482
      %p484 = scmp.ne.s32.totalorder %s475, %s476
      %p485 = scmp.eq.s32.totalorder %s45, 0
      %p486 = por %p484, %p485
      %p487 = scmp.ne.s32.totalorder %s475, %s476
      %p488 = scmp.eq.s32.totalorder %s46, 1
      %p489 = por %p487, %p488
      %p491 = scmp.ne.s32.totalorder %s476, %s490
      %p492 = scmp.eq.s32.totalorder %s46, 0
      %p493 = por %p491, %p492
      %s495 = sadd.s32 %s494, 1
      %p498 = scmp.eq.s32.totalorder %s40, 1
      %p499 = scmp.ne.s32.totalorder %s494, %s496
      %p500 = scmp.eq.s32.totalorder %s40, 0
      %p501 = por %p499, %p500
      %p502 = scmp.ne.s32.totalorder %s494, %s496
      %p503 = scmp.eq.s32.totalorder %s45, 1
      %p504 = por %p502, %p503
      %p505 = scmp.ne.s32.totalorder %s496, %s497
      %p506 = scmp.eq.s32.totalorder %s45, 0
      %p507 = por %p505, %p506
      %p508 = scmp.ne.s32.totalorder %s496, %s497
      %p509 = scmp.eq.s32.totalorder %s46, 1
      %p510 = por %p508, %p509
      %p512 = scmp.ne.s32.totalorder %s497, %s511
      %p513 = scmp.eq.s32.totalorder %s46, 0
      %p514 = por %p512, %p513
      %s516 = sadd.s32 %s515, 1
      %p519 = scmp.eq.s32.totalorder %s40, 1
      %p520 = scmp.ne.s32.totalorder %s515, %s517
      %p521 = scmp.eq.s32.totalorder %s40, 0
      %p522 = por %p520, %p521
      %p523 = scmp.ne.s32.totalorder %s515, %s517
      %p524 = scmp.eq.s32.totalorder %s45, 1
      %p525 = por %p523, %p524
      %p526 = scmp.ne.s32.totalorder %s517, %s518
      %p527 = scmp.eq.s32.totalorder %s45, 0
      %p528 = por %p526, %p527
      %p529 = scmp.ne.s32.totalorder %s517, %s518
      %p530 = scmp.eq.s32.totalorder %s46, 1
      %p531 = por %p529, %p530
      %p533 = scmp.ne.s32.totalorder %s518, %s532
      %p534 = scmp.eq.s32.totalorder %s46, 0
      %p535 = por %p533, %p534
      %s536 = ssub.s32 %s40, %s47
      %p537 = scmp.eq.s32.totalorder %s536, 0
      %s539 = sadd.s32 %s538, 1
      %s540 = scalar_select %p537, %s538, %s539
      %p543 = pneg %p537
      %p544 = scmp.eq.s32.totalorder %s40, 1
      %p545 = por %p543, %p544
      %p546 = scmp.ne.s32.totalorder %s538, %s541
      %p547 = scmp.eq.s32.totalorder %s40, 0
      %p548 = por %p546, %p547
      %p549 = scmp.ne.s32.totalorder %s538, %s541
      %p550 = scmp.eq.s32.totalorder %s45, 1
      %p551 = por %p549, %p550
      %p552 = scmp.ne.s32.totalorder %s541, %s542
      %p553 = scmp.eq.s32.totalorder %s45, 0
      %p554 = por %p552, %p553
      %p555 = scmp.ne.s32.totalorder %s541, %s542
      %p556 = scmp.eq.s32.totalorder %s46, 1
      %p557 = por %p555, %p556
      %p559 = scmp.ne.s32.totalorder %s542, %s558
      %p560 = scmp.eq.s32.totalorder %s46, 0
      %p561 = por %p559, %p560
      %p562 = scmp.le.s32.totalorder 1, %s40
      %p563 = scmp.lt.s32.totalorder %s40, 3
      %p564 = pnand %p562, %p563
      %p565 = pneg %p564
      // Predicated region
      $region9: #{tpu_custom_call.1} parent=5 // pred_check
        _
      $region10: #{tpu_custom_call.1} parent=5 // pred_check_branch
        %567 = sbr.rel (%p564) target = $region12
      $region11: #{tpu_custom_call.1} parent=5 // pred_region
        %s568 = ssub.s32 %s40, 1
        // Predicated region
        $region13: #{tpu_custom_call.1} parent=11 // pred_check
          %p569 = pneg %p87
        $region14: #{tpu_custom_call.1} parent=11 // pred_check_branch
          %571 = sbr.rel (%p569) target = $region16
        $region15: #{tpu_custom_call.1} parent=11 // pred_region
          %s573 = ssub.s32 128, 128
          %574 = vsyncadd [#allocation6], %s573
          %s576 = sshll.u32 [#allocation5], 4
          %s577 = int_to_ptr.vmem [resolvable:$true] %s576
          %579 = dma.hbm_to_vmem [thread:$0]  %s1, 128, %s577, [#allocation6]
        $region16: #{tpu_custom_call.1} parent=11 // pred_fallthru
          _
        // Predicated region
        $region17: #{tpu_custom_call.1} parent=11 // pred_check
          %p580 = pneg %p108
        $region18: #{tpu_custom_call.1} parent=11 // pred_check_branch
          %582 = sbr.rel (%p580) target = $region20
        $region19: #{tpu_custom_call.1} parent=11 // pred_region
          %s584 = ssub.s32 128, 128
          %585 = vsyncadd [#allocation6], %s584
          %s587 = sshll.u32 [#allocation7], 4
          %s588 = int_to_ptr.vmem [resolvable:$true] %s587
          %590 = dma.hbm_to_vmem [thread:$0]  %s2, 128, %s588, [#allocation6]
        $region20: #{tpu_custom_call.1} parent=11 // pred_fallthru
          _
        // Predicated region
        $region21: #{tpu_custom_call.1} parent=11 // pred_check
          %p591 = pneg %p129
        $region22: #{tpu_custom_call.1} parent=11 // pred_check_branch
          %593 = sbr.rel (%p591) target = $region24
        $region23: #{tpu_custom_call.1} parent=11 // pred_region
          %s595 = ssub.s32 128, 128
          %596 = vsyncadd [#allocation9], %s595
          %s598 = sshll.u32 [#allocation8], 4
          %s599 = int_to_ptr.vmem [resolvable:$true] %s598
          %601 = dma.hbm_to_vmem [thread:$0]  %s3, 128, %s599, [#allocation9]
        $region24: #{tpu_custom_call.1} parent=11 // pred_fallthru
          _
        // Predicated region
        $region25: #{tpu_custom_call.1} parent=11 // pred_check
          %p602 = pneg %p150
        $region26: #{tpu_custom_call.1} parent=11 // pred_check_branch
          %604 = sbr.rel (%p602) target = $region28
        $region27: #{tpu_custom_call.1} parent=11 // pred_region
          %s606 = ssub.s32 128, 128
          %607 = vsyncadd [#allocation9], %s606
          %s609 = sshll.u32 [#allocation10], 4
          %s610 = int_to_ptr.vmem [resolvable:$true] %s609
          %612 = dma.hbm_to_vmem [thread:$0]  %s4, 128, %s610, [#allocation9]
        $region28: #{tpu_custom_call.1} parent=11 // pred_fallthru
          _
        // Predicated region
        $region29: #{tpu_custom_call.1} parent=11 // pred_check
          %p613 = pneg %p171
        $region30: #{tpu_custom_call.1} parent=11 // pred_check_branch
          %615 = sbr.rel (%p613) target = $region32
        $region31: #{tpu_custom_call.1} parent=11 // pred_region
          _
        $region32: #{tpu_custom_call.1} parent=11 // pred_fallthru
          _
        // Predicated region
        $region33: #{tpu_custom_call.1} parent=11 // pred_check
          %p616 = pneg %p192
        $region34: #{tpu_custom_call.1} parent=11 // pred_check_branch
          %618 = sbr.rel (%p616) target = $region36
        $region35: #{tpu_custom_call.1} parent=11 // pred_region
          %s620 = ssub.s32 16, 16
          %621 = vsyncadd [#allocation12], %s620
          %s623 = sshll.u32 [#allocation11], 4
          %s624 = int_to_ptr.vmem [resolvable:$true] %s623
          %626 = dma.hbm_to_vmem [thread:$0]  %s6, 16, %s624, [#allocation12]
        $region36: #{tpu_custom_call.1} parent=11 // pred_fallthru
          _
        // Predicated region
        $region37: #{tpu_custom_call.1} parent=11 // pred_check
          %p627 = pneg %p213
        $region38: #{tpu_custom_call.1} parent=11 // pred_check_branch
          %629 = sbr.rel (%p627) target = $region40
        $region39: #{tpu_custom_call.1} parent=11 // pred_region
          _
        $region40: #{tpu_custom_call.1} parent=11 // pred_fallthru
          _
        // Predicated region
        $region41: #{tpu_custom_call.1} parent=11 // pred_check
          %p630 = pneg %p234
        $region42: #{tpu_custom_call.1} parent=11 // pred_check_branch
          %632 = sbr.rel (%p630) target = $region44
        $region43: #{tpu_custom_call.1} parent=11 // pred_region
          %s634 = ssub.s32 16, 16
          %635 = vsyncadd [#allocation12], %s634
          %s637 = sshll.u32 [#allocation13], 4
          %s638 = int_to_ptr.vmem [resolvable:$true] %s637
          %640 = dma.hbm_to_vmem [thread:$0]  %s8, 16, %s638, [#allocation12]
        $region44: #{tpu_custom_call.1} parent=11 // pred_fallthru
          _
        // Predicated region
        $region45: #{tpu_custom_call.1} parent=11 // pred_check
          %p641 = pneg %p255
        $region46: #{tpu_custom_call.1} parent=11 // pred_check_branch
          %643 = sbr.rel (%p641) target = $region48
        $region47: #{tpu_custom_call.1} parent=11 // pred_region
          _
        $region48: #{tpu_custom_call.1} parent=11 // pred_fallthru
          _
        // Predicated region
        $region49: #{tpu_custom_call.1} parent=11 // pred_check
          %p644 = pneg %p276
        $region50: #{tpu_custom_call.1} parent=11 // pred_check_branch
          %646 = sbr.rel (%p644) target = $region52
        $region51: #{tpu_custom_call.1} parent=11 // pred_region
          _
        $region52: #{tpu_custom_call.1} parent=11 // pred_fallthru
          _
        // Predicated region
        $region53: #{tpu_custom_call.1} parent=11 // pred_check
          %p647 = pneg %p297
        $region54: #{tpu_custom_call.1} parent=11 // pred_check_branch
          %649 = sbr.rel (%p647) target = $region56
        $region55: #{tpu_custom_call.1} parent=11 // pred_region
          %s651 = ssub.s32 512, 512
          %652 = vsyncadd [#allocation15], %s651
          %s653 = sshll.u32 [#allocation14], 4
          %s654 = int_to_ptr.vmem [resolvable:$true] %s653
          %659 = dma.hbm_to_vmem [thread:$0]  %s11, 512, %s654, [#allocation15], 128, 128, 8
        $region56: #{tpu_custom_call.1} parent=11 // pred_fallthru
          _
        // Predicated region
        $region57: #{tpu_custom_call.1} parent=11 // pred_check
          %p660 = pneg %p318
        $region58: #{tpu_custom_call.1} parent=11 // pred_check_branch
          %662 = sbr.rel (%p660) target = $region60
        $region59: #{tpu_custom_call.1} parent=11 // pred_region
          _
        $region60: #{tpu_custom_call.1} parent=11 // pred_fallthru
          _
        // Predicated region
        $region61: #{tpu_custom_call.1} parent=11 // pred_check
          %p663 = pneg %p339
        $region62: #{tpu_custom_call.1} parent=11 // pred_check_branch
          %665 = sbr.rel (%p663) target = $region64
        $region63: #{tpu_custom_call.1} parent=11 // pred_region
          %s667 = ssub.s32 512, 512
          %668 = vsyncadd [#allocation15], %s667
          %s669 = sshll.u32 [#allocation16], 4
          %s670 = int_to_ptr.vmem [resolvable:$true] %s669
          %675 = dma.hbm_to_vmem [thread:$0]  %s13, 512, %s670, [#allocation15], 128, 128, 8
        $region64: #{tpu_custom_call.1} parent=11 // pred_fallthru
          _
        // Predicated region
        $region65: #{tpu_custom_call.1} parent=11 // pred_check
          %p676 = pneg %p360
        $region66: #{tpu_custom_call.1} parent=11 // pred_check_branch
          %678 = sbr.rel (%p676) target = $region68
        $region67: #{tpu_custom_call.1} parent=11 // pred_region
          _
        $region68: #{tpu_custom_call.1} parent=11 // pred_fallthru
          _
        // Predicated region
        $region69: #{tpu_custom_call.1} parent=11 // pred_check
          %p679 = pneg %p381
        $region70: #{tpu_custom_call.1} parent=11 // pred_check_branch
          %681 = sbr.rel (%p679) target = $region72
        $region71: #{tpu_custom_call.1} parent=11 // pred_region
          _
        $region72: #{tpu_custom_call.1} parent=11 // pred_fallthru
          _
        // Predicated region
        $region73: #{tpu_custom_call.1} parent=11 // pred_check
          %p682 = pneg %p402
        $region74: #{tpu_custom_call.1} parent=11 // pred_check_branch
          %684 = sbr.rel (%p682) target = $region76
        $region75: #{tpu_custom_call.1} parent=11 // pred_region
          _
        $region76: #{tpu_custom_call.1} parent=11 // pred_fallthru
          _
        // Predicated region
        $region77: #{tpu_custom_call.1} parent=11 // pred_check
          %p685 = pneg %p423
        $region78: #{tpu_custom_call.1} parent=11 // pred_check_branch
          %687 = sbr.rel (%p685) target = $region80
        $region79: #{tpu_custom_call.1} parent=11 // pred_region
          %s689 = ssub.s32 512, 512
          %690 = vsyncadd [#allocation18], %s689
          %s691 = sshll.u32 [#allocation17], 4
          %s692 = int_to_ptr.vmem [resolvable:$true] %s691
          %697 = dma.hbm_to_vmem [thread:$0]  %s17, 512, %s692, [#allocation18], 128, 128, 8
        $region80: #{tpu_custom_call.1} parent=11 // pred_fallthru
          _
        // Predicated region
        $region81: #{tpu_custom_call.1} parent=11 // pred_check
          %p698 = pneg %p444
        $region82: #{tpu_custom_call.1} parent=11 // pred_check_branch
          %700 = sbr.rel (%p698) target = $region84
        $region83: #{tpu_custom_call.1} parent=11 // pred_region
          _
        $region84: #{tpu_custom_call.1} parent=11 // pred_fallthru
          _
        // Predicated region
        $region85: #{tpu_custom_call.1} parent=11 // pred_check
          %p701 = pneg %p465
        $region86: #{tpu_custom_call.1} parent=11 // pred_check_branch
          %703 = sbr.rel (%p701) target = $region88
        $region87: #{tpu_custom_call.1} parent=11 // pred_region
          %s705 = ssub.s32 512, 512
          %706 = vsyncadd [#allocation18], %s705
          %s707 = sshll.u32 [#allocation19], 4
          %s708 = int_to_ptr.vmem [resolvable:$true] %s707
          %713 = dma.hbm_to_vmem [thread:$0]  %s19, 512, %s708, [#allocation18], 128, 128, 8
        $region88: #{tpu_custom_call.1} parent=11 // pred_fallthru
          _
        // Predicated region
        $region89: #{tpu_custom_call.1} parent=11 // pred_check
          %p714 = pneg %p486
        $region90: #{tpu_custom_call.1} parent=11 // pred_check_branch
          %716 = sbr.rel (%p714) target = $region92
        $region91: #{tpu_custom_call.1} parent=11 // pred_region
          _
        $region92: #{tpu_custom_call.1} parent=11 // pred_fallthru
          _
        // Predicated region
        $region93: #{tpu_custom_call.1} parent=11 // pred_check
          %p717 = pneg %p507
        $region94: #{tpu_custom_call.1} parent=11 // pred_check_branch
          %719 = sbr.rel (%p717) target = $region96
        $region95: #{tpu_custom_call.1} parent=11 // pred_region
          _
        $region96: #{tpu_custom_call.1} parent=11 // pred_fallthru
          _
        // Predicated region
        $region97: #{tpu_custom_call.1} parent=11 // pred_check
          %p720 = pneg %p528
        $region98: #{tpu_custom_call.1} parent=11 // pred_check_branch
          %722 = sbr.rel (%p720) target = $region100
        $region99: #{tpu_custom_call.1} parent=11 // pred_region
          _
        $region100: #{tpu_custom_call.1} parent=11 // pred_fallthru
          _
      $region12: #{tpu_custom_call.1} parent=5 // pred_fallthru
        _
      %p723 = scmp.lt.s32.totalorder %s40, 2
      // Predicated region
      $region101: #{tpu_custom_call.1} parent=5 // pred_check
        %p724 = pneg %p723
      $region102: #{tpu_custom_call.1} parent=5 // pred_check_branch
        %726 = sbr.rel (%p724) target = $region104
      $region103: #{tpu_custom_call.1} parent=5 // pred_region
        // Predicated region
        $region105: #{tpu_custom_call.1} parent=103 // pred_check
          %p727 = pneg %p60
        $region106: #{tpu_custom_call.1} parent=103 // pred_check_branch
          %729 = sbr.rel (%p727) target = $region108
        $region107: #{tpu_custom_call.1} parent=103 // pred_region
          %s730 = sand.u32 %s50, 1
          %s731 = scalar_lea.sflag [#allocation3], %s730
          %s732 = sand.u32 %s50, 1
          %s733 = smul.addr %s732, 8
          %s734 = scalar_lea.vmem [#allocation2], %s733
          %s736 = ssub.s32 128, 128
          %737 = vsyncadd %s731, %s736
          %s738 = smul.addr %s40, 128
          %s739 = scalar_lea.hbm %s0, %s738
          %s741 = sshll.u32 %s734, 4
          %s742 = int_to_ptr.vmem [resolvable:$true] %s741
          %744 = dma.hbm_to_vmem [thread:$0]  %s739, 128, %s742, %s731
        $region108: #{tpu_custom_call.1} parent=103 // pred_fallthru
          _
      $region104: #{tpu_custom_call.1} parent=5 // pred_fallthru
        _
      %p745 = scmp.le.s32.totalorder 1, %s40
      %p746 = scmp.lt.s32.totalorder %s40, 3
      %p747 = pnand %p745, %p746
      %p748 = pneg %p747
      // Predicated region
      $region109: #{tpu_custom_call.1} parent=5 // pred_check
        _
      $region110: #{tpu_custom_call.1} parent=5 // pred_check_branch
        %750 = sbr.rel (%p747) target = $region112
      $region111: #{tpu_custom_call.1} parent=5 // pred_region
        %s751 = ssub.s32 %s40, 1
        %s752 = sand.u32 %s53, 1
        %s753 = scalar_lea.sflag [#allocation3], %s752
        %s754 = sand.u32 %s53, 1
        %s755 = smul.addr %s754, 8
        %s756 = scalar_lea.vmem [#allocation2], %s755
        // Predicated region
        $region113: #{tpu_custom_call.1} parent=111 // pred_check
          %p757 = pneg %p66
        $region114: #{tpu_custom_call.1} parent=111 // pred_check_branch
          %759 = sbr.rel (%p757) target = $region116
        $region115: #{tpu_custom_call.1} parent=111 // pred_region
          %760 = dma.done %s753, 128
        $region116: #{tpu_custom_call.1} parent=111 // pred_fallthru
          _
        // Predicated region
        $region117: #{tpu_custom_call.1} parent=111 // pred_check
          %p761 = pneg %p87
        $region118: #{tpu_custom_call.1} parent=111 // pred_check_branch
          %763 = sbr.rel (%p761) target = $region120
        $region119: #{tpu_custom_call.1} parent=111 // pred_region
          %764 = dma.done [#allocation6], 128
        $region120: #{tpu_custom_call.1} parent=111 // pred_fallthru
          _
        // Predicated region
        $region121: #{tpu_custom_call.1} parent=111 // pred_check
          %p765 = pneg %p108
        $region122: #{tpu_custom_call.1} parent=111 // pred_check_branch
          %767 = sbr.rel (%p765) target = $region124
        $region123: #{tpu_custom_call.1} parent=111 // pred_region
          %768 = dma.done [#allocation6], 128
        $region124: #{tpu_custom_call.1} parent=111 // pred_fallthru
          _
        // Predicated region
        $region125: #{tpu_custom_call.1} parent=111 // pred_check
          %p769 = pneg %p129
        $region126: #{tpu_custom_call.1} parent=111 // pred_check_branch
          %771 = sbr.rel (%p769) target = $region128
        $region127: #{tpu_custom_call.1} parent=111 // pred_region
          %772 = dma.done [#allocation9], 128
        $region128: #{tpu_custom_call.1} parent=111 // pred_fallthru
          _
        // Predicated region
        $region129: #{tpu_custom_call.1} parent=111 // pred_check
          %p773 = pneg %p150
        $region130: #{tpu_custom_call.1} parent=111 // pred_check_branch
          %775 = sbr.rel (%p773) target = $region132
        $region131: #{tpu_custom_call.1} parent=111 // pred_region
          %776 = dma.done [#allocation9], 128
        $region132: #{tpu_custom_call.1} parent=111 // pred_fallthru
          _
        // Predicated region
        $region133: #{tpu_custom_call.1} parent=111 // pred_check
          %p777 = pneg %p192
        $region134: #{tpu_custom_call.1} parent=111 // pred_check_branch
          %779 = sbr.rel (%p777) target = $region136
        $region135: #{tpu_custom_call.1} parent=111 // pred_region
          %780 = dma.done [#allocation12], 16
        $region136: #{tpu_custom_call.1} parent=111 // pred_fallthru
          _
        // Predicated region
        $region137: #{tpu_custom_call.1} parent=111 // pred_check
          %p781 = pneg %p234
        $region138: #{tpu_custom_call.1} parent=111 // pred_check_branch
          %783 = sbr.rel (%p781) target = $region140
        $region139: #{tpu_custom_call.1} parent=111 // pred_region
          %784 = dma.done [#allocation12], 16
        $region140: #{tpu_custom_call.1} parent=111 // pred_fallthru
          _
        // Predicated region
        $region141: #{tpu_custom_call.1} parent=111 // pred_check
          %p785 = pneg %p297
        $region142: #{tpu_custom_call.1} parent=111 // pred_check_branch
          %787 = sbr.rel (%p785) target = $region144
        $region143: #{tpu_custom_call.1} parent=111 // pred_region
          %788 = dma.done [#allocation15], 512
        $region144: #{tpu_custom_call.1} parent=111 // pred_fallthru
          _
        // Predicated region
        $region145: #{tpu_custom_call.1} parent=111 // pred_check
          %p789 = pneg %p339
        $region146: #{tpu_custom_call.1} parent=111 // pred_check_branch
          %791 = sbr.rel (%p789) target = $region148
        $region147: #{tpu_custom_call.1} parent=111 // pred_region
          %792 = dma.done [#allocation15], 512
        $region148: #{tpu_custom_call.1} parent=111 // pred_fallthru
          _
        // Predicated region
        $region149: #{tpu_custom_call.1} parent=111 // pred_check
          %p793 = pneg %p423
        $region150: #{tpu_custom_call.1} parent=111 // pred_check_branch
          %795 = sbr.rel (%p793) target = $region152
        $region151: #{tpu_custom_call.1} parent=111 // pred_region
          %796 = dma.done [#allocation18], 512
        $region152: #{tpu_custom_call.1} parent=111 // pred_fallthru
          _
        // Predicated region
        $region153: #{tpu_custom_call.1} parent=111 // pred_check
          %p797 = pneg %p465
        $region154: #{tpu_custom_call.1} parent=111 // pred_check_branch
          %799 = sbr.rel (%p797) target = $region156
        $region155: #{tpu_custom_call.1} parent=111 // pred_region
          %800 = dma.done [#allocation18], 512
        $region156: #{tpu_custom_call.1} parent=111 // pred_fallthru
          _
        %s801 = sand.u32 %s53, 1
        %s802 = scalar_lea.sflag [#allocation3], %s801
        %s803 = sand.u32 %s53, 1
        %s804 = smul.addr %s803, 8
        %s805 = scalar_lea.vmem [#allocation2], %s804
        %p806 = pneg %p66
        %p807 = pneg %p63
        %p808 = pneg %p87
        %p809 = pneg %p84
        %p810 = pneg %p108
        %p811 = pneg %p105
        %p812 = pneg %p129
        %p813 = pneg %p126
        %p814 = pneg %p150
        %p815 = pneg %p147
        %p816 = pneg %p171
        %p817 = pneg %p168
        %p818 = pneg %p192
        %p819 = pneg %p189
        %p820 = pneg %p213
        %p821 = pneg %p210
        %p822 = pneg %p234
        %p823 = pneg %p231
        %p824 = pneg %p255
        %p825 = pneg %p252
        %p826 = pneg %p276
        %p827 = pneg %p273
        %p828 = pneg %p297
        %p829 = pneg %p294
        %p830 = pneg %p318
        %p831 = pneg %p315
        %p832 = pneg %p339
        %p833 = pneg %p336
        %p834 = pneg %p360
        %p835 = pneg %p357
        %p836 = pneg %p381
        %p837 = pneg %p378
        %p838 = pneg %p402
        %p839 = pneg %p399
        %p840 = pneg %p423
        %p841 = pneg %p420
        %p842 = pneg %p444
        %p843 = pneg %p441
        %p844 = pneg %p465
        %p845 = pneg %p462
        %p846 = pneg %p486
        %p847 = pneg %p483
        %p848 = pneg %p507
        %p849 = pneg %p504
        %p850 = pneg %p528
        %p851 = pneg %p525
        %p852 = pneg %p554
        %p853 = pneg %p551
        %s854 = sand.u32 %s541, 1
        %s855 = scalar_lea.sflag [#allocation4], %s854
        %s856 = sand.u32 %s541, 1
        %s857 = smul.addr %s856, 8
        %s858 = scalar_lea.vmem [#allocation20], %s857
        %v859 = vld [vmem:[%s756] sm:$0xff]
        %v860 = vld [vmem:[#allocation5] sm:$0xff]
        %v861 = vld [vmem:[%s5] sm:$0xff]
        %v862 = vld [vmem:[%s5 + $0x8] sm:$0xff]
        %v863 = vld [vmem:[%s5 + $0x10] sm:$0xff]
        %v864 = vld [vmem:[%s5 + $0x18] sm:$0xff]
        %v865 = vld [vmem:[#allocation11] sm:$0x1]
        %v867 = vlaneseq
        %v868 = vshrl.u32 %v867, 7
        %v869 = vsub.s32 0, %v868
        %v870 = vrot.slane %v865, %v869
        %vm872 = vcmask 261120
        %v874 = vsel %vm872, %v859, 0
        %876 = vmatprep.subr.mxu0 0.0
        %877 = vmatpush1.msra.mxu0 0.0
        %878 = vmatprep.subr.mxu0 0.0
        %879 = vmatpush1.msra.mxu0 0.0
        %880 = vmatprep.subr.mxu0 0.0
        %881 = vmatpush1.msra.mxu0 0.0
        %882 = vmatprep.subr.mxu0 0.0
        %883 = vmatpush1.msra.mxu0 0.0
        %884 = vmatprep.subr.mxu0 0.0
        %885 = vmatpush1.msra.mxu0 0.0
        %886 = vmatprep.subr.mxu0 0.0
        %887 = vmatpush1.msra.mxu0 0.0
        %888 = vmatprep.subr.mxu0 0.0
        %889 = vmatpush1.msra.mxu0 0.0
        %890 = vmatprep.subr.mxu0 0.0
        %891 = vmatpush1.msra.mxu0 0.0
        %892 = vmatprep.subr.mxu0 0.0
        %893 = vmatpush1.msra.mxu0 0.0
        %894 = vmatprep.subr.mxu0 0.0
        %895 = vmatpush1.msra.mxu0 0.0
        %896 = vmatprep.subr.mxu0 0.0
        %897 = vmatpush1.msra.mxu0 0.0
        %898 = vmatprep.subr.mxu0 0.0
        %899 = vmatpush1.msra.mxu0 0.0
        %900 = vmatprep.subr.mxu0 0.0
        %901 = vmatpush1.msra.mxu0 %v864
        %902 = vmatprep.subr.mxu0 0.0
        %903 = vmatpush1.msra.mxu0 %v863
        %904 = vmatprep.subr.mxu0 0.0
        %905 = vmatpush1.msra.mxu0 %v862
        %906 = vmatprep.subr.mxu0 0.0
        %907 = vmatpush1.msra.mxu0 %v861
        %908 = vmatprep.subr.mxu0 0.0
        %909 = vmatpush2.msra.mxu0 0.0
        %910 = vmatprep.subr.mxu0 0.0
        %911 = vmatpush2.msra.mxu0 0.0
        %912 = vmatprep.subr.mxu0 0.0
        %913 = vmatpush2.msra.mxu0 0.0
        %914 = vmatprep.subr.mxu0 0.0
        %915 = vmatpush2.msra.mxu0 0.0
        %916 = vmatprep.subr.mxu0 0.0
        %917 = vmatpush2.msra.mxu0 0.0
        %918 = vmatprep.subr.mxu0 0.0
        %919 = vmatpush2.msra.mxu0 0.0
        %920 = vmatprep.subr.mxu0 0.0
        %921 = vmatpush2.msra.mxu0 0.0
        %922 = vmatprep.subr.mxu0 0.0
        %923 = vmatpush2.msra.mxu0 0.0
        %924 = vmatprep.subr.mxu0 0.0
        %925 = vmatpush2.msra.mxu0 0.0
        %926 = vmatprep.subr.mxu0 0.0
        %927 = vmatpush2.msra.mxu0 0.0
        %928 = vmatprep.subr.mxu0 0.0
        %929 = vmatpush2.msra.mxu0 0.0
        %930 = vmatprep.subr.mxu0 0.0
        %931 = vmatpush2.msra.mxu0 0.0
        %932 = vmatprep.subr.mxu0 0.0
        %933 = vmatpush2.msra.mxu0 0.0
        %934 = vmatprep.subr.mxu0 0.0
        %935 = vmatpush2.msra.mxu0 0.0
        %936 = vmatprep.subr.mxu0 0.0
        %937 = vmatpush2.msra.mxu0 0.0
        %938 = vmatprep.subr.mxu0 0.0
        %939 = vmatpush2.msra.mxu0 0.0
        %940 = vmatprep.mubr.f32.mxu0 0.0
        %941 = vmatmul.mubr.f32.gmra.mxu0 %v874
        %v942 = vpop.f32.mrf.mxu0
        %v943 = vadd.f32 %v870, %v942
        %v944 = vpop.f32.mrf.mxu0
        %945 = vdwg.mxu0
        %v946 = vld [vmem:[%s7] sm:$0xff]
        %v947 = vld [vmem:[%s7 + $0x8] sm:$0xff]
        %v948 = vld [vmem:[%s7 + $0x10] sm:$0xff]
        %v949 = vld [vmem:[%s7 + $0x18] sm:$0xff]
        %v950 = vld [vmem:[#allocation7] sm:$0xff]
        %vm951 = vcmask 130048
        %v953 = vsel %vm951, %v950, 0
        %955 = vmatprep.subr.mxu0 0.0
        %956 = vmatpush1.msra.mxu0 0.0
        %957 = vmatprep.subr.mxu0 0.0
        %958 = vmatpush1.msra.mxu0 0.0
        %959 = vmatprep.subr.mxu0 0.0
        %960 = vmatpush1.msra.mxu0 0.0
        %961 = vmatprep.subr.mxu0 0.0
        %962 = vmatpush1.msra.mxu0 0.0
        %963 = vmatprep.subr.mxu0 0.0
        %964 = vmatpush1.msra.mxu0 0.0
        %965 = vmatprep.subr.mxu0 0.0
        %966 = vmatpush1.msra.mxu0 0.0
        %967 = vmatprep.subr.mxu0 0.0
        %968 = vmatpush1.msra.mxu0 0.0
        %969 = vmatprep.subr.mxu0 0.0
        %970 = vmatpush1.msra.mxu0 0.0
        %971 = vmatprep.subr.mxu0 0.0
        %972 = vmatpush1.msra.mxu0 0.0
        %973 = vmatprep.subr.mxu0 0.0
        %974 = vmatpush1.msra.mxu0 0.0
        %975 = vmatprep.subr.mxu0 0.0
        %976 = vmatpush1.msra.mxu0 0.0
        %977 = vmatprep.subr.mxu0 0.0
        %978 = vmatpush1.msra.mxu0 0.0
        %979 = vmatprep.subr.mxu0 0.0
        %980 = vmatpush1.msra.mxu0 0.0
        %981 = vmatprep.subr.mxu0 0.0
        %982 = vmatpush1.msra.mxu0 0.0
        %983 = vmatprep.subr.mxu0 0.0
        %984 = vmatpush1.msra.mxu0 %v949
        %985 = vmatprep.subr.mxu0 0.0
        %986 = vmatpush1.msra.mxu0 %v948
        %987 = vmatprep.subr.mxu0 0.0
        %988 = vmatpush2.msra.mxu0 0.0
        %989 = vmatprep.subr.mxu0 0.0
        %990 = vmatpush2.msra.mxu0 0.0
        %991 = vmatprep.subr.mxu0 0.0
        %992 = vmatpush2.msra.mxu0 0.0
        %993 = vmatprep.subr.mxu0 0.0
        %994 = vmatpush2.msra.mxu0 0.0
        %995 = vmatprep.subr.mxu0 0.0
        %996 = vmatpush2.msra.mxu0 0.0
        %997 = vmatprep.subr.mxu0 0.0
        %998 = vmatpush2.msra.mxu0 0.0
        %999 = vmatprep.subr.mxu0 0.0
        %1000 = vmatpush2.msra.mxu0 0.0
        %1001 = vmatprep.subr.mxu0 0.0
        %1002 = vmatpush2.msra.mxu0 0.0
        %1003 = vmatprep.subr.mxu0 0.0
        %1004 = vmatpush2.msra.mxu0 0.0
        %1005 = vmatprep.subr.mxu0 0.0
        %1006 = vmatpush2.msra.mxu0 0.0
        %1007 = vmatprep.subr.mxu0 0.0
        %1008 = vmatpush2.msra.mxu0 0.0
        %1009 = vmatprep.subr.mxu0 0.0
        %1010 = vmatpush2.msra.mxu0 0.0
        %1011 = vmatprep.subr.mxu0 0.0
        %1012 = vmatpush2.msra.mxu0 0.0
        %1013 = vmatprep.subr.mxu0 0.0
        %1014 = vmatpush2.msra.mxu0 0.0
        %1015 = vmatprep.subr.mxu0 0.0
        %1016 = vmatpush2.msra.mxu0 0.0
        %1017 = vmatprep.subr.mxu0 0.0
        %1018 = vmatpush2.msra.mxu0 0.0
        %1019 = vmatprep.mubr.f32.mxu0 0.0
        %1020 = vmatmul.mubr.f32.gmra.mxu0 %v953
        %v1021 = vpop.f32.mrf.mxu0
        %v1022 = vadd.f32 0.0, %v1021
        %v1023 = vpop.f32.mrf.mxu0
        %1024 = vdwg.mxu0
        %v1026 = vsel %vm951, %v943, 0
        %1028 = vmatprep.subr.mxu0 0.0
        %1029 = vmatpush1.msra.mxu0 0.0
        %1030 = vmatprep.subr.mxu0 0.0
        %1031 = vmatpush1.msra.mxu0 0.0
        %1032 = vmatprep.subr.mxu0 0.0
        %1033 = vmatpush1.msra.mxu0 0.0
        %1034 = vmatprep.subr.mxu0 0.0
        %1035 = vmatpush1.msra.mxu0 0.0
        %1036 = vmatprep.subr.mxu0 0.0
        %1037 = vmatpush1.msra.mxu0 0.0
        %1038 = vmatprep.subr.mxu0 0.0
        %1039 = vmatpush1.msra.mxu0 0.0
        %1040 = vmatprep.subr.mxu0 0.0
        %1041 = vmatpush1.msra.mxu0 0.0
        %1042 = vmatprep.subr.mxu0 0.0
        %1043 = vmatpush1.msra.mxu0 0.0
        %1044 = vmatprep.subr.mxu0 0.0
        %1045 = vmatpush1.msra.mxu0 0.0
        %1046 = vmatprep.subr.mxu0 0.0
        %1047 = vmatpush1.msra.mxu0 0.0
        %1048 = vmatprep.subr.mxu0 0.0
        %1049 = vmatpush1.msra.mxu0 0.0
        %1050 = vmatprep.subr.mxu0 0.0
        %1051 = vmatpush1.msra.mxu0 0.0
        %1052 = vmatprep.subr.mxu0 0.0
        %1053 = vmatpush1.msra.mxu0 0.0
        %1054 = vmatprep.subr.mxu0 0.0
        %1055 = vmatpush1.msra.mxu0 0.0
        %1056 = vmatprep.subr.mxu0 0.0
        %1057 = vmatpush1.msra.mxu0 %v947
        %1058 = vmatprep.subr.mxu0 0.0
        %1059 = vmatpush1.msra.mxu0 %v946
        %1060 = vmatprep.subr.mxu0 0.0
        %1061 = vmatpush2.msra.mxu0 0.0
        %1062 = vmatprep.subr.mxu0 0.0
        %1063 = vmatpush2.msra.mxu0 0.0
        %1064 = vmatprep.subr.mxu0 0.0
        %1065 = vmatpush2.msra.mxu0 0.0
        %1066 = vmatprep.subr.mxu0 0.0
        %1067 = vmatpush2.msra.mxu0 0.0
        %1068 = vmatprep.subr.mxu0 0.0
        %1069 = vmatpush2.msra.mxu0 0.0
        %1070 = vmatprep.subr.mxu0 0.0
        %1071 = vmatpush2.msra.mxu0 0.0
        %1072 = vmatprep.subr.mxu0 0.0
        %1073 = vmatpush2.msra.mxu0 0.0
        %1074 = vmatprep.subr.mxu0 0.0
        %1075 = vmatpush2.msra.mxu0 0.0
        %1076 = vmatprep.subr.mxu0 0.0
        %1077 = vmatpush2.msra.mxu0 0.0
        %1078 = vmatprep.subr.mxu0 0.0
        %1079 = vmatpush2.msra.mxu0 0.0
        %1080 = vmatprep.subr.mxu0 0.0
        %1081 = vmatpush2.msra.mxu0 0.0
        %1082 = vmatprep.subr.mxu0 0.0
        %1083 = vmatpush2.msra.mxu0 0.0
        %1084 = vmatprep.subr.mxu0 0.0
        %1085 = vmatpush2.msra.mxu0 0.0
        %1086 = vmatprep.subr.mxu0 0.0
        %1087 = vmatpush2.msra.mxu0 0.0
        %1088 = vmatprep.subr.mxu0 0.0
        %1089 = vmatpush2.msra.mxu0 0.0
        %1090 = vmatprep.subr.mxu0 0.0
        %1091 = vmatpush2.msra.mxu0 0.0
        %1092 = vmatprep.mubr.f32.mxu0 0.0
        %1093 = vmatmul.mubr.f32.gmra.mxu0 %v1026
        %v1094 = vpop.f32.mrf.mxu0
        %v1095 = vadd.f32 %v1022, %v1094
        %v1096 = vpop.f32.mrf.mxu0
        %1097 = vdwg.mxu0
        %v1098 = vld [vmem:[#allocation13] sm:$0x1]
        %v1100 = vlaneseq
        %v1101 = vshrl.u32 %v1100, 7
        %v1102 = vsub.s32 0, %v1101
        %v1103 = vrot.slane %v1098, %v1102
        %v1105 = vadd.f32 %v1095, %v1103
        %v1106 = vld [vmem:[%s9] sm:$0xff]
        %v1107 = vld [vmem:[%s9 + $0x8] sm:$0xff]
        %v1108 = vld [vmem:[%s9 + $0x10] sm:$0xff]
        %v1109 = vld [vmem:[%s9 + $0x18] sm:$0xff]
        %v1110 = vld [vmem:[#allocation8] sm:$0xff]
        %v1112 = vsel %vm951, %v1110, 0
        %1114 = vmatprep.subr.mxu0 0.0
        %1115 = vmatpush1.msra.mxu0 0.0
        %1116 = vmatprep.subr.mxu0 0.0
        %1117 = vmatpush1.msra.mxu0 0.0
        %1118 = vmatprep.subr.mxu0 0.0
        %1119 = vmatpush1.msra.mxu0 0.0
        %1120 = vmatprep.subr.mxu0 0.0
        %1121 = vmatpush1.msra.mxu0 0.0
        %1122 = vmatprep.subr.mxu0 0.0
        %1123 = vmatpush1.msra.mxu0 0.0
        %1124 = vmatprep.subr.mxu0 0.0
        %1125 = vmatpush1.msra.mxu0 0.0
        %1126 = vmatprep.subr.mxu0 0.0
        %1127 = vmatpush1.msra.mxu0 0.0
        %1128 = vmatprep.subr.mxu0 0.0
        %1129 = vmatpush1.msra.mxu0 0.0
        %1130 = vmatprep.subr.mxu0 0.0
        %1131 = vmatpush1.msra.mxu0 0.0
        %1132 = vmatprep.subr.mxu0 0.0
        %1133 = vmatpush1.msra.mxu0 0.0
        %1134 = vmatprep.subr.mxu0 0.0
        %1135 = vmatpush1.msra.mxu0 0.0
        %1136 = vmatprep.subr.mxu0 0.0
        %1137 = vmatpush1.msra.mxu0 0.0
        %1138 = vmatprep.subr.mxu0 0.0
        %1139 = vmatpush1.msra.mxu0 0.0
        %1140 = vmatprep.subr.mxu0 0.0
        %1141 = vmatpush1.msra.mxu0 0.0
        %1142 = vmatprep.subr.mxu0 0.0
        %1143 = vmatpush1.msra.mxu0 %v1109
        %1144 = vmatprep.subr.mxu0 0.0
        %1145 = vmatpush1.msra.mxu0 %v1108
        %1146 = vmatprep.subr.mxu0 0.0
        %1147 = vmatpush2.msra.mxu0 0.0
        %1148 = vmatprep.subr.mxu0 0.0
        %1149 = vmatpush2.msra.mxu0 0.0
        %1150 = vmatprep.subr.mxu0 0.0
        %1151 = vmatpush2.msra.mxu0 0.0
        %1152 = vmatprep.subr.mxu0 0.0
        %1153 = vmatpush2.msra.mxu0 0.0
        %1154 = vmatprep.subr.mxu0 0.0
        %1155 = vmatpush2.msra.mxu0 0.0
        %1156 = vmatprep.subr.mxu0 0.0
        %1157 = vmatpush2.msra.mxu0 0.0
        %1158 = vmatprep.subr.mxu0 0.0
        %1159 = vmatpush2.msra.mxu0 0.0
        %1160 = vmatprep.subr.mxu0 0.0
        %1161 = vmatpush2.msra.mxu0 0.0
        %1162 = vmatprep.subr.mxu0 0.0
        %1163 = vmatpush2.msra.mxu0 0.0
        %1164 = vmatprep.subr.mxu0 0.0
        %1165 = vmatpush2.msra.mxu0 0.0
        %1166 = vmatprep.subr.mxu0 0.0
        %1167 = vmatpush2.msra.mxu0 0.0
        %1168 = vmatprep.subr.mxu0 0.0
        %1169 = vmatpush2.msra.mxu0 0.0
        %1170 = vmatprep.subr.mxu0 0.0
        %1171 = vmatpush2.msra.mxu0 0.0
        %1172 = vmatprep.subr.mxu0 0.0
        %1173 = vmatpush2.msra.mxu0 0.0
        %1174 = vmatprep.subr.mxu0 0.0
        %1175 = vmatpush2.msra.mxu0 0.0
        %1176 = vmatprep.subr.mxu0 0.0
        %1177 = vmatpush2.msra.mxu0 0.0
        %1178 = vmatprep.mubr.f32.mxu0 0.0
        %1179 = vmatmul.mubr.f32.gmra.mxu0 %v1112
        %v1180 = vpop.f32.mrf.mxu0
        %v1181 = vadd.f32 0.0, %v1180
        %v1182 = vpop.f32.mrf.mxu0
        %1183 = vdwg.mxu0
        %1184 = vmatprep.subr.mxu0 0.0
        %1185 = vmatpush1.msra.mxu0 0.0
        %1186 = vmatprep.subr.mxu0 0.0
        %1187 = vmatpush1.msra.mxu0 0.0
        %1188 = vmatprep.subr.mxu0 0.0
        %1189 = vmatpush1.msra.mxu0 0.0
        %1190 = vmatprep.subr.mxu0 0.0
        %1191 = vmatpush1.msra.mxu0 0.0
        %1192 = vmatprep.subr.mxu0 0.0
        %1193 = vmatpush1.msra.mxu0 0.0
        %1194 = vmatprep.subr.mxu0 0.0
        %1195 = vmatpush1.msra.mxu0 0.0
        %1196 = vmatprep.subr.mxu0 0.0
        %1197 = vmatpush1.msra.mxu0 0.0
        %1198 = vmatprep.subr.mxu0 0.0
        %1199 = vmatpush1.msra.mxu0 0.0
        %1200 = vmatprep.subr.mxu0 0.0
        %1201 = vmatpush1.msra.mxu0 0.0
        %1202 = vmatprep.subr.mxu0 0.0
        %1203 = vmatpush1.msra.mxu0 0.0
        %1204 = vmatprep.subr.mxu0 0.0
        %1205 = vmatpush1.msra.mxu0 0.0
        %1206 = vmatprep.subr.mxu0 0.0
        %1207 = vmatpush1.msra.mxu0 0.0
        %1208 = vmatprep.subr.mxu0 0.0
        %1209 = vmatpush1.msra.mxu0 0.0
        %1210 = vmatprep.subr.mxu0 0.0
        %1211 = vmatpush1.msra.mxu0 0.0
        %1212 = vmatprep.subr.mxu0 0.0
        %1213 = vmatpush1.msra.mxu0 %v1107
        %1214 = vmatprep.subr.mxu0 0.0
        %1215 = vmatpush1.msra.mxu0 %v1106
        %1216 = vmatprep.subr.mxu0 0.0
        %1217 = vmatpush2.msra.mxu0 0.0
        %1218 = vmatprep.subr.mxu0 0.0
        %1219 = vmatpush2.msra.mxu0 0.0
        %1220 = vmatprep.subr.mxu0 0.0
        %1221 = vmatpush2.msra.mxu0 0.0
        %1222 = vmatprep.subr.mxu0 0.0
        %1223 = vmatpush2.msra.mxu0 0.0
        %1224 = vmatprep.subr.mxu0 0.0
        %1225 = vmatpush2.msra.mxu0 0.0
        %1226 = vmatprep.subr.mxu0 0.0
        %1227 = vmatpush2.msra.mxu0 0.0
        %1228 = vmatprep.subr.mxu0 0.0
        %1229 = vmatpush2.msra.mxu0 0.0
        %1230 = vmatprep.subr.mxu0 0.0
        %1231 = vmatpush2.msra.mxu0 0.0
        %1232 = vmatprep.subr.mxu0 0.0
        %1233 = vmatpush2.msra.mxu0 0.0
        %1234 = vmatprep.subr.mxu0 0.0
        %1235 = vmatpush2.msra.mxu0 0.0
        %1236 = vmatprep.subr.mxu0 0.0
        %1237 = vmatpush2.msra.mxu0 0.0
        %1238 = vmatprep.subr.mxu0 0.0
        %1239 = vmatpush2.msra.mxu0 0.0
        %1240 = vmatprep.subr.mxu0 0.0
        %1241 = vmatpush2.msra.mxu0 0.0
        %1242 = vmatprep.subr.mxu0 0.0
        %1243 = vmatpush2.msra.mxu0 0.0
        %1244 = vmatprep.subr.mxu0 0.0
        %1245 = vmatpush2.msra.mxu0 0.0
        %1246 = vmatprep.subr.mxu0 0.0
        %1247 = vmatpush2.msra.mxu0 0.0
        %1248 = vmatprep.mubr.f32.mxu0 0.0
        %1249 = vmatmul.mubr.f32.gmra.mxu0 %v1026
        %v1250 = vpop.f32.mrf.mxu0
        %v1251 = vadd.f32 %v1181, %v1250
        %v1252 = vpop.f32.mrf.mxu0
        %1253 = vdwg.mxu0
        %v1254 = vld [vmem:[%s10] sm:$0x1]
        %v1256 = vlaneseq
        %v1257 = vshrl.u32 %v1256, 7
        %v1258 = vsub.s32 0, %v1257
        %v1259 = vrot.slane %v1254, %v1258
        %v1261 = vadd.f32 %v1251, %v1259
        %v1262 = vld [vmem:[#allocation14] sm:$0xff]
        %v1263 = vld [vmem:[#allocation14 + $0x8] sm:$0xff]
        %v1264 = vld [vmem:[#allocation14 + $0x10] sm:$0xff]
        %v1265 = vld [vmem:[#allocation14 + $0x18] sm:$0xff]
        %v1266 = vld [vmem:[#allocation10] sm:$0xff]
        %v1268 = vsel %vm951, %v1266, 0
        %1270 = vmatprep.subr.mxu0 0.0
        %1271 = vmatpush1.msra.mxu0 0.0
        %1272 = vmatprep.subr.mxu0 0.0
        %1273 = vmatpush1.msra.mxu0 0.0
        %1274 = vmatprep.subr.mxu0 0.0
        %1275 = vmatpush1.msra.mxu0 0.0
        %1276 = vmatprep.subr.mxu0 0.0
        %1277 = vmatpush1.msra.mxu0 0.0
        %1278 = vmatprep.subr.mxu0 0.0
        %1279 = vmatpush1.msra.mxu0 0.0
        %1280 = vmatprep.subr.mxu0 0.0
        %1281 = vmatpush1.msra.mxu0 0.0
        %1282 = vmatprep.subr.mxu0 0.0
        %1283 = vmatpush1.msra.mxu0 0.0
        %1284 = vmatprep.subr.mxu0 0.0
        %1285 = vmatpush1.msra.mxu0 0.0
        %1286 = vmatprep.subr.mxu0 0.0
        %1287 = vmatpush1.msra.mxu0 0.0
        %1288 = vmatprep.subr.mxu0 0.0
        %1289 = vmatpush1.msra.mxu0 0.0
        %1290 = vmatprep.subr.mxu0 0.0
        %1291 = vmatpush1.msra.mxu0 0.0
        %1292 = vmatprep.subr.mxu0 0.0
        %1293 = vmatpush1.msra.mxu0 0.0
        %1294 = vmatprep.subr.mxu0 0.0
        %1295 = vmatpush1.msra.mxu0 0.0
        %1296 = vmatprep.subr.mxu0 0.0
        %1297 = vmatpush1.msra.mxu0 0.0
        %1298 = vmatprep.subr.mxu0 0.0
        %1299 = vmatpush1.msra.mxu0 %v1265
        %1300 = vmatprep.subr.mxu0 0.0
        %1301 = vmatpush1.msra.mxu0 %v1264
        %1302 = vmatprep.subr.mxu0 0.0
        %1303 = vmatpush2.msra.mxu0 0.0
        %1304 = vmatprep.subr.mxu0 0.0
        %1305 = vmatpush2.msra.mxu0 0.0
        %1306 = vmatprep.subr.mxu0 0.0
        %1307 = vmatpush2.msra.mxu0 0.0
        %1308 = vmatprep.subr.mxu0 0.0
        %1309 = vmatpush2.msra.mxu0 0.0
        %1310 = vmatprep.subr.mxu0 0.0
        %1311 = vmatpush2.msra.mxu0 0.0
        %1312 = vmatprep.subr.mxu0 0.0
        %1313 = vmatpush2.msra.mxu0 0.0
        %1314 = vmatprep.subr.mxu0 0.0
        %1315 = vmatpush2.msra.mxu0 0.0
        %1316 = vmatprep.subr.mxu0 0.0
        %1317 = vmatpush2.msra.mxu0 0.0
        %1318 = vmatprep.subr.mxu0 0.0
        %1319 = vmatpush2.msra.mxu0 0.0
        %1320 = vmatprep.subr.mxu0 0.0
        %1321 = vmatpush2.msra.mxu0 0.0
        %1322 = vmatprep.subr.mxu0 0.0
        %1323 = vmatpush2.msra.mxu0 0.0
        %1324 = vmatprep.subr.mxu0 0.0
        %1325 = vmatpush2.msra.mxu0 0.0
        %1326 = vmatprep.subr.mxu0 0.0
        %1327 = vmatpush2.msra.mxu0 0.0
        %1328 = vmatprep.subr.mxu0 0.0
        %1329 = vmatpush2.msra.mxu0 0.0
        %1330 = vmatprep.subr.mxu0 0.0
        %1331 = vmatpush2.msra.mxu0 0.0
        %1332 = vmatprep.subr.mxu0 0.0
        %1333 = vmatpush2.msra.mxu0 0.0
        %1334 = vmatprep.mubr.f32.mxu0 0.0
        %1335 = vmatmul.mubr.f32.gmra.mxu0 %v1268
        %v1336 = vpop.f32.mrf.mxu0
        %v1337 = vadd.f32 0.0, %v1336
        %v1338 = vpop.f32.mrf.mxu0
        %1339 = vdwg.mxu0
        %1340 = vmatprep.subr.mxu0 0.0
        %1341 = vmatpush1.msra.mxu0 0.0
        %1342 = vmatprep.subr.mxu0 0.0
        %1343 = vmatpush1.msra.mxu0 0.0
        %1344 = vmatprep.subr.mxu0 0.0
        %1345 = vmatpush1.msra.mxu0 0.0
        %1346 = vmatprep.subr.mxu0 0.0
        %1347 = vmatpush1.msra.mxu0 0.0
        %1348 = vmatprep.subr.mxu0 0.0
        %1349 = vmatpush1.msra.mxu0 0.0
        %1350 = vmatprep.subr.mxu0 0.0
        %1351 = vmatpush1.msra.mxu0 0.0
        %1352 = vmatprep.subr.mxu0 0.0
        %1353 = vmatpush1.msra.mxu0 0.0
        %1354 = vmatprep.subr.mxu0 0.0
        %1355 = vmatpush1.msra.mxu0 0.0
        %1356 = vmatprep.subr.mxu0 0.0
        %1357 = vmatpush1.msra.mxu0 0.0
        %1358 = vmatprep.subr.mxu0 0.0
        %1359 = vmatpush1.msra.mxu0 0.0
        %1360 = vmatprep.subr.mxu0 0.0
        %1361 = vmatpush1.msra.mxu0 0.0
        %1362 = vmatprep.subr.mxu0 0.0
        %1363 = vmatpush1.msra.mxu0 0.0
        %1364 = vmatprep.subr.mxu0 0.0
        %1365 = vmatpush1.msra.mxu0 0.0
        %1366 = vmatprep.subr.mxu0 0.0
        %1367 = vmatpush1.msra.mxu0 0.0
        %1368 = vmatprep.subr.mxu0 0.0
        %1369 = vmatpush1.msra.mxu0 %v1263
        %1370 = vmatprep.subr.mxu0 0.0
        %1371 = vmatpush1.msra.mxu0 %v1262
        %1372 = vmatprep.subr.mxu0 0.0
        %1373 = vmatpush2.msra.mxu0 0.0
        %1374 = vmatprep.subr.mxu0 0.0
        %1375 = vmatpush2.msra.mxu0 0.0
        %1376 = vmatprep.subr.mxu0 0.0
        %1377 = vmatpush2.msra.mxu0 0.0
        %1378 = vmatprep.subr.mxu0 0.0
        %1379 = vmatpush2.msra.mxu0 0.0
        %1380 = vmatprep.subr.mxu0 0.0
        %1381 = vmatpush2.msra.mxu0 0.0
        %1382 = vmatprep.subr.mxu0 0.0
        %1383 = vmatpush2.msra.mxu0 0.0
        %1384 = vmatprep.subr.mxu0 0.0
        %1385 = vmatpush2.msra.mxu0 0.0
        %1386 = vmatprep.subr.mxu0 0.0
        %1387 = vmatpush2.msra.mxu0 0.0
        %1388 = vmatprep.subr.mxu0 0.0
        %1389 = vmatpush2.msra.mxu0 0.0
        %1390 = vmatprep.subr.mxu0 0.0
        %1391 = vmatpush2.msra.mxu0 0.0
        %1392 = vmatprep.subr.mxu0 0.0
        %1393 = vmatpush2.msra.mxu0 0.0
        %1394 = vmatprep.subr.mxu0 0.0
        %1395 = vmatpush2.msra.mxu0 0.0
        %1396 = vmatprep.subr.mxu0 0.0
        %1397 = vmatpush2.msra.mxu0 0.0
        %1398 = vmatprep.subr.mxu0 0.0
        %1399 = vmatpush2.msra.mxu0 0.0
        %1400 = vmatprep.subr.mxu0 0.0
        %1401 = vmatpush2.msra.mxu0 0.0
        %1402 = vmatprep.subr.mxu0 0.0
        %1403 = vmatpush2.msra.mxu0 0.0
        %1404 = vmatprep.mubr.f32.mxu0 0.0
        %1405 = vmatmul.mubr.f32.gmra.mxu0 %v1026
        %v1406 = vpop.f32.mrf.mxu0
        %v1407 = vadd.f32 %v1337, %v1406
        %v1408 = vpop.f32.mrf.mxu0
        %1409 = vdwg.mxu0
        %v1410 = vld [vmem:[%s12] sm:$0x1]
        %v1412 = vlaneseq
        %v1413 = vshrl.u32 %v1412, 7
        %v1414 = vsub.s32 0, %v1413
        %v1415 = vrot.slane %v1410, %v1414
        %v1417 = vadd.f32 %v1407, %v1415
        %v1418 = vld [vmem:[#allocation16] sm:$0xff]
        %v1419 = vld [vmem:[#allocation16 + $0x8] sm:$0xff]
        %v1420 = vld [vmem:[#allocation16 + $0x10] sm:$0xff]
        %v1421 = vld [vmem:[#allocation16 + $0x18] sm:$0xff]
        %v1422 = vmul.f32 %v1105, 0.25
        %v1424 = vsel %vm951, %v1422, 0
        %v1427 = vsel %vm951, %v1261, 0
        %1429 = vmatprep.subr.mxu0 0.0
        %1430 = vmatpush1.xpose.msra.mxu0 0.0
        %1431 = vmatprep.subr.mxu0 0.0
        %1432 = vmatpush1.xpose.msra.mxu0 0.0
        %1433 = vmatprep.subr.mxu0 0.0
        %1434 = vmatpush1.xpose.msra.mxu0 0.0
        %1435 = vmatprep.subr.mxu0 0.0
        %1436 = vmatpush1.xpose.msra.mxu0 0.0
        %1437 = vmatprep.subr.mxu0 0.0
        %1438 = vmatpush1.xpose.msra.mxu0 0.0
        %1439 = vmatprep.subr.mxu0 0.0
        %1440 = vmatpush1.xpose.msra.mxu0 0.0
        %1441 = vmatprep.subr.mxu0 0.0
        %1442 = vmatpush1.xpose.msra.mxu0 0.0
        %1443 = vmatprep.subr.mxu0 0.0
        %1444 = vmatpush1.xpose.msra.mxu0 0.0
        %1445 = vmatprep.subr.mxu0 0.0
        %1446 = vmatpush1.xpose.msra.mxu0 0.0
        %1447 = vmatprep.subr.mxu0 0.0
        %1448 = vmatpush1.xpose.msra.mxu0 0.0
        %1449 = vmatprep.subr.mxu0 0.0
        %1450 = vmatpush1.xpose.msra.mxu0 0.0
        %1451 = vmatprep.subr.mxu0 0.0
        %1452 = vmatpush1.xpose.msra.mxu0 0.0
        %1453 = vmatprep.subr.mxu0 0.0
        %1454 = vmatpush1.xpose.msra.mxu0 0.0
        %1455 = vmatprep.subr.mxu0 0.0
        %1456 = vmatpush1.xpose.msra.mxu0 0.0
        %1457 = vmatprep.subr.mxu0 0.0
        %1458 = vmatpush1.xpose.msra.mxu0 0.0
        %1459 = vmatprep.subr.mxu0 0.0
        %1460 = vmatpush1.xpose.msra.mxu0 %v1427
        %1461 = vmatprep.subr.mxu0 0.0
        %1462 = vmatpush2.xpose.msra.mxu0 0.0
        %1463 = vmatprep.subr.mxu0 0.0
        %1464 = vmatpush2.xpose.msra.mxu0 0.0
        %1465 = vmatprep.subr.mxu0 0.0
        %1466 = vmatpush2.xpose.msra.mxu0 0.0
        %1467 = vmatprep.subr.mxu0 0.0
        %1468 = vmatpush2.xpose.msra.mxu0 0.0
        %1469 = vmatprep.subr.mxu0 0.0
        %1470 = vmatpush2.xpose.msra.mxu0 0.0
        %1471 = vmatprep.subr.mxu0 0.0
        %1472 = vmatpush2.xpose.msra.mxu0 0.0
        %1473 = vmatprep.subr.mxu0 0.0
        %1474 = vmatpush2.xpose.msra.mxu0 0.0
        %1475 = vmatprep.subr.mxu0 0.0
        %1476 = vmatpush2.xpose.msra.mxu0 0.0
        %1477 = vmatprep.subr.mxu0 0.0
        %1478 = vmatpush2.xpose.msra.mxu0 0.0
        %1479 = vmatprep.subr.mxu0 0.0
        %1480 = vmatpush2.xpose.msra.mxu0 0.0
        %1481 = vmatprep.subr.mxu0 0.0
        %1482 = vmatpush2.xpose.msra.mxu0 0.0
        %1483 = vmatprep.subr.mxu0 0.0
        %1484 = vmatpush2.xpose.msra.mxu0 0.0
        %1485 = vmatprep.subr.mxu0 0.0
        %1486 = vmatpush2.xpose.msra.mxu0 0.0
        %1487 = vmatprep.subr.mxu0 0.0
        %1488 = vmatpush2.xpose.msra.mxu0 0.0
        %1489 = vmatprep.subr.mxu0 0.0
        %1490 = vmatpush2.xpose.msra.mxu0 0.0
        %1491 = vmatprep.subr.mxu0 0.0
        %1492 = vmatpush2.xpose.msra.mxu0 0.0
        %1493 = vmatprep.mubr.f32.mxu0 0.0
        %1494 = vmatmul.mubr.f32.gmra.mxu0 %v1424
        %v1495 = vpop.f32.mrf.mxu0
        %v1496 = vadd.f32 %v860, %v1495
        %v1497 = vpop.f32.mrf.mxu0
        %1498 = vdwg.mxu0
        %vm1499 = vcmask 64512
        %v1500 = vsel %vm1499, %v1496, -inf
        %1501 = vmax.xlane.f32.xlu0 %v1500
        %v1502 = vpop.xlane.xlu0 %1501
        %v1503 = vsub.f32 %v1496, %v1502
        %v1504 = vmul.f32 %v1503, 1.442695
        %v1505 = vpow.pop %v1504
        %v1506 = vsel %vm1499, %v1505, 0.0
        %1507 = vadd.xlane.f32.xlu0 %v1506
        %v1508 = vpop.xlane.xlu0 %1507
        %v1509 = vrcp.pop %v1508
        %v1510 = vmul.f32 %v1505, %v1509
        %v1512 = vsel %vm1499, %v1510, 0
        %1514 = vmatprep.subr.mxu0 0.0
        %1515 = vmatpush1.msra.mxu0 0.0
        %1516 = vmatprep.subr.mxu0 0.0
        %1517 = vmatpush1.msra.mxu0 0.0
        %1518 = vmatprep.subr.mxu0 0.0
        %1519 = vmatpush1.msra.mxu0 0.0
        %1520 = vmatprep.subr.mxu0 0.0
        %1521 = vmatpush1.msra.mxu0 0.0
        %1522 = vmatprep.subr.mxu0 0.0
        %1523 = vmatpush1.msra.mxu0 0.0
        %1524 = vmatprep.subr.mxu0 0.0
        %1525 = vmatpush1.msra.mxu0 0.0
        %1526 = vmatprep.subr.mxu0 0.0
        %1527 = vmatpush1.msra.mxu0 0.0
        %1528 = vmatprep.subr.mxu0 0.0
        %1529 = vmatpush1.msra.mxu0 0.0
        %1530 = vmatprep.subr.mxu0 0.0
        %1531 = vmatpush1.msra.mxu0 0.0
        %1532 = vmatprep.subr.mxu0 0.0
        %1533 = vmatpush1.msra.mxu0 0.0
        %1534 = vmatprep.subr.mxu0 0.0
        %1535 = vmatpush1.msra.mxu0 0.0
        %1536 = vmatprep.subr.mxu0 0.0
        %1537 = vmatpush1.msra.mxu0 0.0
        %1538 = vmatprep.subr.mxu0 0.0
        %1539 = vmatpush1.msra.mxu0 0.0
        %1540 = vmatprep.subr.mxu0 0.0
        %1541 = vmatpush1.msra.mxu0 0.0
        %1542 = vmatprep.subr.mxu0 0.0
        %1543 = vmatpush1.msra.mxu0 0.0
        %1544 = vmatprep.subr.mxu0 0.0
        %1545 = vmatpush1.msra.mxu0 %v1417
        %1546 = vmatprep.subr.mxu0 0.0
        %1547 = vmatpush2.msra.mxu0 0.0
        %1548 = vmatprep.subr.mxu0 0.0
        %1549 = vmatpush2.msra.mxu0 0.0
        %1550 = vmatprep.subr.mxu0 0.0
        %1551 = vmatpush2.msra.mxu0 0.0
        %1552 = vmatprep.subr.mxu0 0.0
        %1553 = vmatpush2.msra.mxu0 0.0
        %1554 = vmatprep.subr.mxu0 0.0
        %1555 = vmatpush2.msra.mxu0 0.0
        %1556 = vmatprep.subr.mxu0 0.0
        %1557 = vmatpush2.msra.mxu0 0.0
        %1558 = vmatprep.subr.mxu0 0.0
        %1559 = vmatpush2.msra.mxu0 0.0
        %1560 = vmatprep.subr.mxu0 0.0
        %1561 = vmatpush2.msra.mxu0 0.0
        %1562 = vmatprep.subr.mxu0 0.0
        %1563 = vmatpush2.msra.mxu0 0.0
        %1564 = vmatprep.subr.mxu0 0.0
        %1565 = vmatpush2.msra.mxu0 0.0
        %1566 = vmatprep.subr.mxu0 0.0
        %1567 = vmatpush2.msra.mxu0 0.0
        %1568 = vmatprep.subr.mxu0 0.0
        %1569 = vmatpush2.msra.mxu0 0.0
        %1570 = vmatprep.subr.mxu0 0.0
        %1571 = vmatpush2.msra.mxu0 0.0
        %1572 = vmatprep.subr.mxu0 0.0
        %1573 = vmatpush2.msra.mxu0 0.0
        %1574 = vmatprep.subr.mxu0 0.0
        %1575 = vmatpush2.msra.mxu0 0.0
        %1576 = vmatprep.subr.mxu0 0.0
        %1577 = vmatpush2.msra.mxu0 0.0
        %1578 = vmatprep.mubr.f32.mxu0 0.0
        %1579 = vmatmul.mubr.f32.gmra.mxu0 %v1512
        %v1580 = vpop.f32.mrf.mxu0
        %v1581 = vadd.f32 0.0, %v1580
        %v1582 = vpop.f32.mrf.mxu0
        %1583 = vdwg.mxu0
        %1584 = vrot.lane.b32.xlu0 %v1422, 112
        %v1585 = vpop.permute.xlu0 %1584
        %1586 = vrot.lane.b32.xlu0 %v1261, 112
        %v1587 = vpop.permute.xlu0 %1586
        %v1588 = vsel %vm951, %v1585, 0
        %v1590 = vsel %vm951, %v1587, 0
        %1592 = vmatprep.subr.mxu0 0.0
        %1593 = vmatpush1.xpose.msra.mxu0 0.0
        %1594 = vmatprep.subr.mxu0 0.0
        %1595 = vmatpush1.xpose.msra.mxu0 0.0
        %1596 = vmatprep.subr.mxu0 0.0
        %1597 = vmatpush1.xpose.msra.mxu0 0.0
        %1598 = vmatprep.subr.mxu0 0.0
        %1599 = vmatpush1.xpose.msra.mxu0 0.0
        %1600 = vmatprep.subr.mxu0 0.0
        %1601 = vmatpush1.xpose.msra.mxu0 0.0
        %1602 = vmatprep.subr.mxu0 0.0
        %1603 = vmatpush1.xpose.msra.mxu0 0.0
        %1604 = vmatprep.subr.mxu0 0.0
        %1605 = vmatpush1.xpose.msra.mxu0 0.0
        %1606 = vmatprep.subr.mxu0 0.0
        %1607 = vmatpush1.xpose.msra.mxu0 0.0
        %1608 = vmatprep.subr.mxu0 0.0
        %1609 = vmatpush1.xpose.msra.mxu0 0.0
        %1610 = vmatprep.subr.mxu0 0.0
        %1611 = vmatpush1.xpose.msra.mxu0 0.0
        %1612 = vmatprep.subr.mxu0 0.0
        %1613 = vmatpush1.xpose.msra.mxu0 0.0
        %1614 = vmatprep.subr.mxu0 0.0
        %1615 = vmatpush1.xpose.msra.mxu0 0.0
        %1616 = vmatprep.subr.mxu0 0.0
        %1617 = vmatpush1.xpose.msra.mxu0 0.0
        %1618 = vmatprep.subr.mxu0 0.0
        %1619 = vmatpush1.xpose.msra.mxu0 0.0
        %1620 = vmatprep.subr.mxu0 0.0
        %1621 = vmatpush1.xpose.msra.mxu0 0.0
        %1622 = vmatprep.subr.mxu0 0.0
        %1623 = vmatpush1.xpose.msra.mxu0 %v1590
        %1624 = vmatprep.subr.mxu0 0.0
        %1625 = vmatpush2.xpose.msra.mxu0 0.0
        %1626 = vmatprep.subr.mxu0 0.0
        %1627 = vmatpush2.xpose.msra.mxu0 0.0
        %1628 = vmatprep.subr.mxu0 0.0
        %1629 = vmatpush2.xpose.msra.mxu0 0.0
        %1630 = vmatprep.subr.mxu0 0.0
        %1631 = vmatpush2.xpose.msra.mxu0 0.0
        %1632 = vmatprep.subr.mxu0 0.0
        %1633 = vmatpush2.xpose.msra.mxu0 0.0
        %1634 = vmatprep.subr.mxu0 0.0
        %1635 = vmatpush2.xpose.msra.mxu0 0.0
        %1636 = vmatprep.subr.mxu0 0.0
        %1637 = vmatpush2.xpose.msra.mxu0 0.0
        %1638 = vmatprep.subr.mxu0 0.0
        %1639 = vmatpush2.xpose.msra.mxu0 0.0
        %1640 = vmatprep.subr.mxu0 0.0
        %1641 = vmatpush2.xpose.msra.mxu0 0.0
        %1642 = vmatprep.subr.mxu0 0.0
        %1643 = vmatpush2.xpose.msra.mxu0 0.0
        %1644 = vmatprep.subr.mxu0 0.0
        %1645 = vmatpush2.xpose.msra.mxu0 0.0
        %1646 = vmatprep.subr.mxu0 0.0
        %1647 = vmatpush2.xpose.msra.mxu0 0.0
        %1648 = vmatprep.subr.mxu0 0.0
        %1649 = vmatpush2.xpose.msra.mxu0 0.0
        %1650 = vmatprep.subr.mxu0 0.0
        %1651 = vmatpush2.xpose.msra.mxu0 0.0
        %1652 = vmatprep.subr.mxu0 0.0
        %1653 = vmatpush2.xpose.msra.mxu0 0.0
        %1654 = vmatprep.subr.mxu0 0.0
        %1655 = vmatpush2.xpose.msra.mxu0 0.0
        %1656 = vmatprep.mubr.f32.mxu0 0.0
        %1657 = vmatmul.mubr.f32.gmra.mxu0 %v1588
        %v1658 = vpop.f32.mrf.mxu0
        %v1659 = vadd.f32 %v860, %v1658
        %v1660 = vpop.f32.mrf.mxu0
        %1661 = vdwg.mxu0
        %v1662 = vsel %vm1499, %v1659, -inf
        %1663 = vmax.xlane.f32.xlu0 %v1662
        %v1664 = vpop.xlane.xlu0 %1663
        %v1665 = vsub.f32 %v1659, %v1664
        %v1666 = vmul.f32 %v1665, 1.442695
        %v1667 = vpow.pop %v1666
        %v1668 = vsel %vm1499, %v1667, 0.0
        %1669 = vadd.xlane.f32.xlu0 %v1668
        %v1670 = vpop.xlane.xlu0 %1669
        %v1671 = vrcp.pop %v1670
        %v1672 = vmul.f32 %v1667, %v1671
        %1674 = vrot.lane.b32.xlu0 %v1417, 112
        %v1675 = vpop.permute.xlu0 %1674
        %v1678 = vsel %vm1499, %v1672, 0
        %1680 = vmatprep.subr.mxu0 0.0
        %1681 = vmatpush1.msra.mxu0 0.0
        %1682 = vmatprep.subr.mxu0 0.0
        %1683 = vmatpush1.msra.mxu0 0.0
        %1684 = vmatprep.subr.mxu0 0.0
        %1685 = vmatpush1.msra.mxu0 0.0
        %1686 = vmatprep.subr.mxu0 0.0
        %1687 = vmatpush1.msra.mxu0 0.0
        %1688 = vmatprep.subr.mxu0 0.0
        %1689 = vmatpush1.msra.mxu0 0.0
        %1690 = vmatprep.subr.mxu0 0.0
        %1691 = vmatpush1.msra.mxu0 0.0
        %1692 = vmatprep.subr.mxu0 0.0
        %1693 = vmatpush1.msra.mxu0 0.0
        %1694 = vmatprep.subr.mxu0 0.0
        %1695 = vmatpush1.msra.mxu0 0.0
        %1696 = vmatprep.subr.mxu0 0.0
        %1697 = vmatpush1.msra.mxu0 0.0
        %1698 = vmatprep.subr.mxu0 0.0
        %1699 = vmatpush1.msra.mxu0 0.0
        %1700 = vmatprep.subr.mxu0 0.0
        %1701 = vmatpush1.msra.mxu0 0.0
        %1702 = vmatprep.subr.mxu0 0.0
        %1703 = vmatpush1.msra.mxu0 0.0
        %1704 = vmatprep.subr.mxu0 0.0
        %1705 = vmatpush1.msra.mxu0 0.0
        %1706 = vmatprep.subr.mxu0 0.0
        %1707 = vmatpush1.msra.mxu0 0.0
        %1708 = vmatprep.subr.mxu0 0.0
        %1709 = vmatpush1.msra.mxu0 0.0
        %1710 = vmatprep.subr.mxu0 0.0
        %1711 = vmatpush1.msra.mxu0 %v1675
        %1712 = vmatprep.subr.mxu0 0.0
        %1713 = vmatpush2.msra.mxu0 0.0
        %1714 = vmatprep.subr.mxu0 0.0
        %1715 = vmatpush2.msra.mxu0 0.0
        %1716 = vmatprep.subr.mxu0 0.0
        %1717 = vmatpush2.msra.mxu0 0.0
        %1718 = vmatprep.subr.mxu0 0.0
        %1719 = vmatpush2.msra.mxu0 0.0
        %1720 = vmatprep.subr.mxu0 0.0
        %1721 = vmatpush2.msra.mxu0 0.0
        %1722 = vmatprep.subr.mxu0 0.0
        %1723 = vmatpush2.msra.mxu0 0.0
        %1724 = vmatprep.subr.mxu0 0.0
        %1725 = vmatpush2.msra.mxu0 0.0
        %1726 = vmatprep.subr.mxu0 0.0
        %1727 = vmatpush2.msra.mxu0 0.0
        %1728 = vmatprep.subr.mxu0 0.0
        %1729 = vmatpush2.msra.mxu0 0.0
        %1730 = vmatprep.subr.mxu0 0.0
        %1731 = vmatpush2.msra.mxu0 0.0
        %1732 = vmatprep.subr.mxu0 0.0
        %1733 = vmatpush2.msra.mxu0 0.0
        %1734 = vmatprep.subr.mxu0 0.0
        %1735 = vmatpush2.msra.mxu0 0.0
        %1736 = vmatprep.subr.mxu0 0.0
        %1737 = vmatpush2.msra.mxu0 0.0
        %1738 = vmatprep.subr.mxu0 0.0
        %1739 = vmatpush2.msra.mxu0 0.0
        %1740 = vmatprep.subr.mxu0 0.0
        %1741 = vmatpush2.msra.mxu0 0.0
        %1742 = vmatprep.subr.mxu0 0.0
        %1743 = vmatpush2.msra.mxu0 0.0
        %1744 = vmatprep.mubr.f32.mxu0 0.0
        %1745 = vmatmul.mubr.f32.gmra.mxu0 %v1678
        %v1746 = vpop.f32.mrf.mxu0
        %v1747 = vadd.f32 0.0, %v1746
        %v1748 = vpop.f32.mrf.mxu0
        %1749 = vdwg.mxu0
        %v1751 = vsel %vm951, %v1747, 0
        %1753 = vmatprep.subr.mxu0 0.0
        %1754 = vmatpush1.msra.mxu0 0.0
        %1755 = vmatprep.subr.mxu0 0.0
        %1756 = vmatpush1.msra.mxu0 0.0
        %1757 = vmatprep.subr.mxu0 0.0
        %1758 = vmatpush1.msra.mxu0 0.0
        %1759 = vmatprep.subr.mxu0 0.0
        %1760 = vmatpush1.msra.mxu0 0.0
        %1761 = vmatprep.subr.mxu0 0.0
        %1762 = vmatpush1.msra.mxu0 0.0
        %1763 = vmatprep.subr.mxu0 0.0
        %1764 = vmatpush1.msra.mxu0 0.0
        %1765 = vmatprep.subr.mxu0 0.0
        %1766 = vmatpush1.msra.mxu0 0.0
        %1767 = vmatprep.subr.mxu0 0.0
        %1768 = vmatpush1.msra.mxu0 0.0
        %1769 = vmatprep.subr.mxu0 0.0
        %1770 = vmatpush1.msra.mxu0 0.0
        %1771 = vmatprep.subr.mxu0 0.0
        %1772 = vmatpush1.msra.mxu0 0.0
        %1773 = vmatprep.subr.mxu0 0.0
        %1774 = vmatpush1.msra.mxu0 0.0
        %1775 = vmatprep.subr.mxu0 0.0
        %1776 = vmatpush1.msra.mxu0 0.0
        %1777 = vmatprep.subr.mxu0 0.0
        %1778 = vmatpush1.msra.mxu0 0.0
        %1779 = vmatprep.subr.mxu0 0.0
        %1780 = vmatpush1.msra.mxu0 0.0
        %1781 = vmatprep.subr.mxu0 0.0
        %1782 = vmatpush1.msra.mxu0 %v1421
        %1783 = vmatprep.subr.mxu0 0.0
        %1784 = vmatpush1.msra.mxu0 %v1420
        %1785 = vmatprep.subr.mxu0 0.0
        %1786 = vmatpush2.msra.mxu0 0.0
        %1787 = vmatprep.subr.mxu0 0.0
        %1788 = vmatpush2.msra.mxu0 0.0
        %1789 = vmatprep.subr.mxu0 0.0
        %1790 = vmatpush2.msra.mxu0 0.0
        %1791 = vmatprep.subr.mxu0 0.0
        %1792 = vmatpush2.msra.mxu0 0.0
        %1793 = vmatprep.subr.mxu0 0.0
        %1794 = vmatpush2.msra.mxu0 0.0
        %1795 = vmatprep.subr.mxu0 0.0
        %1796 = vmatpush2.msra.mxu0 0.0
        %1797 = vmatprep.subr.mxu0 0.0
        %1798 = vmatpush2.msra.mxu0 0.0
        %1799 = vmatprep.subr.mxu0 0.0
        %1800 = vmatpush2.msra.mxu0 0.0
        %1801 = vmatprep.subr.mxu0 0.0
        %1802 = vmatpush2.msra.mxu0 0.0
        %1803 = vmatprep.subr.mxu0 0.0
        %1804 = vmatpush2.msra.mxu0 0.0
        %1805 = vmatprep.subr.mxu0 0.0
        %1806 = vmatpush2.msra.mxu0 0.0
        %1807 = vmatprep.subr.mxu0 0.0
        %1808 = vmatpush2.msra.mxu0 0.0
        %1809 = vmatprep.subr.mxu0 0.0
        %1810 = vmatpush2.msra.mxu0 0.0
        %1811 = vmatprep.subr.mxu0 0.0
        %1812 = vmatpush2.msra.mxu0 0.0
        %1813 = vmatprep.subr.mxu0 0.0
        %1814 = vmatpush2.msra.mxu0 0.0
        %1815 = vmatprep.subr.mxu0 0.0
        %1816 = vmatpush2.msra.mxu0 0.0
        %1817 = vmatprep.mubr.f32.mxu0 0.0
        %1818 = vmatmul.mubr.f32.gmra.mxu0 %v1751
        %v1819 = vpop.f32.mrf.mxu0
        %v1820 = vadd.f32 0.0, %v1819
        %v1821 = vpop.f32.mrf.mxu0
        %1822 = vdwg.mxu0
        %v1824 = vsel %vm951, %v1581, 0
        %1826 = vmatprep.subr.mxu0 0.0
        %1827 = vmatpush1.msra.mxu0 0.0
        %1828 = vmatprep.subr.mxu0 0.0
        %1829 = vmatpush1.msra.mxu0 0.0
        %1830 = vmatprep.subr.mxu0 0.0
        %1831 = vmatpush1.msra.mxu0 0.0
        %1832 = vmatprep.subr.mxu0 0.0
        %1833 = vmatpush1.msra.mxu0 0.0
        %1834 = vmatprep.subr.mxu0 0.0
        %1835 = vmatpush1.msra.mxu0 0.0
        %1836 = vmatprep.subr.mxu0 0.0
        %1837 = vmatpush1.msra.mxu0 0.0
        %1838 = vmatprep.subr.mxu0 0.0
        %1839 = vmatpush1.msra.mxu0 0.0
        %1840 = vmatprep.subr.mxu0 0.0
        %1841 = vmatpush1.msra.mxu0 0.0
        %1842 = vmatprep.subr.mxu0 0.0
        %1843 = vmatpush1.msra.mxu0 0.0
        %1844 = vmatprep.subr.mxu0 0.0
        %1845 = vmatpush1.msra.mxu0 0.0
        %1846 = vmatprep.subr.mxu0 0.0
        %1847 = vmatpush1.msra.mxu0 0.0
        %1848 = vmatprep.subr.mxu0 0.0
        %1849 = vmatpush1.msra.mxu0 0.0
        %1850 = vmatprep.subr.mxu0 0.0
        %1851 = vmatpush1.msra.mxu0 0.0
        %1852 = vmatprep.subr.mxu0 0.0
        %1853 = vmatpush1.msra.mxu0 0.0
        %1854 = vmatprep.subr.mxu0 0.0
        %1855 = vmatpush1.msra.mxu0 %v1419
        %1856 = vmatprep.subr.mxu0 0.0
        %1857 = vmatpush1.msra.mxu0 %v1418
        %1858 = vmatprep.subr.mxu0 0.0
        %1859 = vmatpush2.msra.mxu0 0.0
        %1860 = vmatprep.subr.mxu0 0.0
        %1861 = vmatpush2.msra.mxu0 0.0
        %1862 = vmatprep.subr.mxu0 0.0
        %1863 = vmatpush2.msra.mxu0 0.0
        %1864 = vmatprep.subr.mxu0 0.0
        %1865 = vmatpush2.msra.mxu0 0.0
        %1866 = vmatprep.subr.mxu0 0.0
        %1867 = vmatpush2.msra.mxu0 0.0
        %1868 = vmatprep.subr.mxu0 0.0
        %1869 = vmatpush2.msra.mxu0 0.0
        %1870 = vmatprep.subr.mxu0 0.0
        %1871 = vmatpush2.msra.mxu0 0.0
        %1872 = vmatprep.subr.mxu0 0.0
        %1873 = vmatpush2.msra.mxu0 0.0
        %1874 = vmatprep.subr.mxu0 0.0
        %1875 = vmatpush2.msra.mxu0 0.0
        %1876 = vmatprep.subr.mxu0 0.0
        %1877 = vmatpush2.msra.mxu0 0.0
        %1878 = vmatprep.subr.mxu0 0.0
        %1879 = vmatpush2.msra.mxu0 0.0
        %1880 = vmatprep.subr.mxu0 0.0
        %1881 = vmatpush2.msra.mxu0 0.0
        %1882 = vmatprep.subr.mxu0 0.0
        %1883 = vmatpush2.msra.mxu0 0.0
        %1884 = vmatprep.subr.mxu0 0.0
        %1885 = vmatpush2.msra.mxu0 0.0
        %1886 = vmatprep.subr.mxu0 0.0
        %1887 = vmatpush2.msra.mxu0 0.0
        %1888 = vmatprep.subr.mxu0 0.0
        %1889 = vmatpush2.msra.mxu0 0.0
        %1890 = vmatprep.mubr.f32.mxu0 0.0
        %1891 = vmatmul.mubr.f32.gmra.mxu0 %v1824
        %v1892 = vpop.f32.mrf.mxu0
        %v1893 = vadd.f32 %v1820, %v1892
        %v1894 = vpop.f32.mrf.mxu0
        %1895 = vdwg.mxu0
        %v1896 = vld [vmem:[%s14] sm:$0x1]
        %v1898 = vlaneseq
        %v1899 = vshrl.u32 %v1898, 7
        %v1900 = vsub.s32 0, %v1899
        %v1901 = vrot.slane %v1896, %v1900
        %v1903 = vadd.f32 %v1893, %v1901
        %v1904 = vadd.f32 %v859, %v1903
        %v1905 = vld [vmem:[%s15] sm:$0x1]
        %v1906 = vld [vmem:[%s16] sm:$0x1]
        %v1907 = vsel %vm872, %v1904, 0.0
        %1908 = vadd.xlane.f32.xlu0 %v1907
        %v1909 = vpop.xlane.xlu0 %1908
        %v1910 = vrcp.pop 32.0
        %v1911 = vmul.f32 %v1909, %v1910
        %v1912 = vsub.f32 %v1904, %v1911
        %v1913 = vmul.f32 %v1912, %v1912
        %v1914 = vsel %vm872, %v1913, 0.0
        %1915 = vadd.xlane.f32.xlu0 %v1914
        %v1916 = vpop.xlane.xlu0 %1915
        %v1917 = vmul.f32 %v1916, %v1910
        %v1918 = vadd.f32 %v1917, 1e-05
        %v1919 = vrsqrt.pop %v1918
        %v1920 = vmul.f32 %v1912, %v1919
        %v1922 = vlaneseq
        %v1923 = vshrl.u32 %v1922, 7
        %v1924 = vsub.s32 0, %v1923
        %v1925 = vrot.slane %v1905, %v1924
        %v1927 = vmul.f32 %v1920, %v1925
        %v1929 = vlaneseq
        %v1930 = vshrl.u32 %v1929, 7
        %v1931 = vsub.s32 0, %v1930
        %v1932 = vrot.slane %v1906, %v1931
        %v1934 = vadd.f32 %v1927, %v1932
        %v1935 = vld [vmem:[#allocation17] sm:$0xff]
        %v1936 = vld [vmem:[#allocation17 + $0x8] sm:$0xff]
        %v1937 = vld [vmem:[#allocation17 + $0x10] sm:$0xff]
        %v1938 = vld [vmem:[#allocation17 + $0x18] sm:$0xff]
        %v1939 = vld [vmem:[%s18] sm:$0x1]
        %v1941 = vlaneseq
        %v1942 = vshrl.u32 %v1941, 7
        %v1943 = vsub.s32 0, %v1942
        %v1944 = vrot.slane %v1939, %v1943
        %v1947 = vsel %vm872, %v1934, 0
        %1949 = vmatprep.subr.mxu0 0.0
        %1950 = vmatpush1.msra.mxu0 0.0
        %1951 = vmatprep.subr.mxu0 0.0
        %1952 = vmatpush1.msra.mxu0 0.0
        %1953 = vmatprep.subr.mxu0 0.0
        %1954 = vmatpush1.msra.mxu0 0.0
        %1955 = vmatprep.subr.mxu0 0.0
        %1956 = vmatpush1.msra.mxu0 0.0
        %1957 = vmatprep.subr.mxu0 0.0
        %1958 = vmatpush1.msra.mxu0 0.0
        %1959 = vmatprep.subr.mxu0 0.0
        %1960 = vmatpush1.msra.mxu0 0.0
        %1961 = vmatprep.subr.mxu0 0.0
        %1962 = vmatpush1.msra.mxu0 0.0
        %1963 = vmatprep.subr.mxu0 0.0
        %1964 = vmatpush1.msra.mxu0 0.0
        %1965 = vmatprep.subr.mxu0 0.0
        %1966 = vmatpush1.msra.mxu0 0.0
        %1967 = vmatprep.subr.mxu0 0.0
        %1968 = vmatpush1.msra.mxu0 0.0
        %1969 = vmatprep.subr.mxu0 0.0
        %1970 = vmatpush1.msra.mxu0 0.0
        %1971 = vmatprep.subr.mxu0 0.0
        %1972 = vmatpush1.msra.mxu0 0.0
        %1973 = vmatprep.subr.mxu0 0.0
        %1974 = vmatpush1.msra.mxu0 %v1938
        %1975 = vmatprep.subr.mxu0 0.0
        %1976 = vmatpush1.msra.mxu0 %v1937
        %1977 = vmatprep.subr.mxu0 0.0
        %1978 = vmatpush1.msra.mxu0 %v1936
        %1979 = vmatprep.subr.mxu0 0.0
        %1980 = vmatpush1.msra.mxu0 %v1935
        %1981 = vmatprep.subr.mxu0 0.0
        %1982 = vmatpush2.msra.mxu0 0.0
        %1983 = vmatprep.subr.mxu0 0.0
        %1984 = vmatpush2.msra.mxu0 0.0
        %1985 = vmatprep.subr.mxu0 0.0
        %1986 = vmatpush2.msra.mxu0 0.0
        %1987 = vmatprep.subr.mxu0 0.0
        %1988 = vmatpush2.msra.mxu0 0.0
        %1989 = vmatprep.subr.mxu0 0.0
        %1990 = vmatpush2.msra.mxu0 0.0
        %1991 = vmatprep.subr.mxu0 0.0
        %1992 = vmatpush2.msra.mxu0 0.0
        %1993 = vmatprep.subr.mxu0 0.0
        %1994 = vmatpush2.msra.mxu0 0.0
        %1995 = vmatprep.subr.mxu0 0.0
        %1996 = vmatpush2.msra.mxu0 0.0
        %1997 = vmatprep.subr.mxu0 0.0
        %1998 = vmatpush2.msra.mxu0 0.0
        %1999 = vmatprep.subr.mxu0 0.0
        %2000 = vmatpush2.msra.mxu0 0.0
        %2001 = vmatprep.subr.mxu0 0.0
        %2002 = vmatpush2.msra.mxu0 0.0
        %2003 = vmatprep.subr.mxu0 0.0
        %2004 = vmatpush2.msra.mxu0 0.0
        %2005 = vmatprep.subr.mxu0 0.0
        %2006 = vmatpush2.msra.mxu0 0.0
        %2007 = vmatprep.subr.mxu0 0.0
        %2008 = vmatpush2.msra.mxu0 0.0
        %2009 = vmatprep.subr.mxu0 0.0
        %2010 = vmatpush2.msra.mxu0 0.0
        %2011 = vmatprep.subr.mxu0 0.0
        %2012 = vmatpush2.msra.mxu0 0.0
        %2013 = vmatprep.mubr.f32.mxu0 0.0
        %2014 = vmatmul.mubr.f32.gmra.mxu0 %v1947
        %v2015 = vpop.f32.mrf.mxu0
        %v2016 = vadd.f32 %v1944, %v2015
        %v2017 = vpop.f32.mrf.mxu0
        %2018 = vdwg.mxu0
        %v2019 = vmul.f32 %v2016, 0.5
        %v2020 = vmul.f32 %v2016, 0.044715
        %v2021 = vmul.f32 %v2020, %v2016
        %v2022 = vmul.f32 %v2021, %v2016
        %v2023 = vadd.f32 %v2016, %v2022
        %v2024 = vmul.f32 %v2023, 0.7978846
        %v2025 = vtanh.pop %v2024
        %v2026 = vadd.f32 %v2025, 1.0
        %v2027 = vmul.f32 %v2019, %v2026
        %v2028 = vld [vmem:[#allocation19] sm:$0xff]
        %v2029 = vld [vmem:[#allocation19 + $0x8] sm:$0xff]
        %v2030 = vld [vmem:[#allocation19 + $0x10] sm:$0xff]
        %v2031 = vld [vmem:[#allocation19 + $0x18] sm:$0xff]
        %v2032 = vld [vmem:[%s20] sm:$0x1]
        %v2034 = vlaneseq
        %v2035 = vshrl.u32 %v2034, 7
        %v2036 = vsub.s32 0, %v2035
        %v2037 = vrot.slane %v2032, %v2036
        %v2040 = vsel %vm872, %v2027, 0
        %2042 = vmatprep.subr.mxu0 0.0
        %2043 = vmatpush1.msra.mxu0 0.0
        %2044 = vmatprep.subr.mxu0 0.0
        %2045 = vmatpush1.msra.mxu0 0.0
        %2046 = vmatprep.subr.mxu0 0.0
        %2047 = vmatpush1.msra.mxu0 0.0
        %2048 = vmatprep.subr.mxu0 0.0
        %2049 = vmatpush1.msra.mxu0 0.0
        %2050 = vmatprep.subr.mxu0 0.0
        %2051 = vmatpush1.msra.mxu0 0.0
        %2052 = vmatprep.subr.mxu0 0.0
        %2053 = vmatpush1.msra.mxu0 0.0
        %2054 = vmatprep.subr.mxu0 0.0
        %2055 = vmatpush1.msra.mxu0 0.0
        %2056 = vmatprep.subr.mxu0 0.0
        %2057 = vmatpush1.msra.mxu0 0.0
        %2058 = vmatprep.subr.mxu0 0.0
        %2059 = vmatpush1.msra.mxu0 0.0
        %2060 = vmatprep.subr.mxu0 0.0
        %2061 = vmatpush1.msra.mxu0 0.0
        %2062 = vmatprep.subr.mxu0 0.0
        %2063 = vmatpush1.msra.mxu0 0.0
        %2064 = vmatprep.subr.mxu0 0.0
        %2065 = vmatpush1.msra.mxu0 0.0
        %2066 = vmatprep.subr.mxu0 0.0
        %2067 = vmatpush1.msra.mxu0 %v2031
        %2068 = vmatprep.subr.mxu0 0.0
        %2069 = vmatpush1.msra.mxu0 %v2030
        %2070 = vmatprep.subr.mxu0 0.0
        %2071 = vmatpush1.msra.mxu0 %v2029
        %2072 = vmatprep.subr.mxu0 0.0
        %2073 = vmatpush1.msra.mxu0 %v2028
        %2074 = vmatprep.subr.mxu0 0.0
        %2075 = vmatpush2.msra.mxu0 0.0
        %2076 = vmatprep.subr.mxu0 0.0
        %2077 = vmatpush2.msra.mxu0 0.0
        %2078 = vmatprep.subr.mxu0 0.0
        %2079 = vmatpush2.msra.mxu0 0.0
        %2080 = vmatprep.subr.mxu0 0.0
        %2081 = vmatpush2.msra.mxu0 0.0
        %2082 = vmatprep.subr.mxu0 0.0
        %2083 = vmatpush2.msra.mxu0 0.0
        %2084 = vmatprep.subr.mxu0 0.0
        %2085 = vmatpush2.msra.mxu0 0.0
        %2086 = vmatprep.subr.mxu0 0.0
        %2087 = vmatpush2.msra.mxu0 0.0
        %2088 = vmatprep.subr.mxu0 0.0
        %2089 = vmatpush2.msra.mxu0 0.0
        %2090 = vmatprep.subr.mxu0 0.0
        %2091 = vmatpush2.msra.mxu0 0.0
        %2092 = vmatprep.subr.mxu0 0.0
        %2093 = vmatpush2.msra.mxu0 0.0
        %2094 = vmatprep.subr.mxu0 0.0
        %2095 = vmatpush2.msra.mxu0 0.0
        %2096 = vmatprep.subr.mxu0 0.0
        %2097 = vmatpush2.msra.mxu0 0.0
        %2098 = vmatprep.subr.mxu0 0.0
        %2099 = vmatpush2.msra.mxu0 0.0
        %2100 = vmatprep.subr.mxu0 0.0
        %2101 = vmatpush2.msra.mxu0 0.0
        %2102 = vmatprep.subr.mxu0 0.0
        %2103 = vmatpush2.msra.mxu0 0.0
        %2104 = vmatprep.subr.mxu0 0.0
        %2105 = vmatpush2.msra.mxu0 0.0
        %2106 = vmatprep.mubr.f32.mxu0 0.0
        %2107 = vmatmul.mubr.f32.gmra.mxu0 %v2040
        %v2108 = vpop.f32.mrf.mxu0
        %v2109 = vadd.f32 %v2037, %v2108
        %v2110 = vpop.f32.mrf.mxu0
        %2111 = vdwg.mxu0
        %v2112 = vadd.f32 %v1934, %v2109
        %v2113 = vld [vmem:[%s21] sm:$0x1]
        %v2114 = vld [vmem:[%s22] sm:$0x1]
        %v2115 = vsel %vm872, %v2112, 0.0
        %2116 = vadd.xlane.f32.xlu0 %v2115
        %v2117 = vpop.xlane.xlu0 %2116
        %v2118 = vmul.f32 %v2117, %v1910
        %v2119 = vsub.f32 %v2112, %v2118
        %v2120 = vmul.f32 %v2119, %v2119
        %v2121 = vsel %vm872, %v2120, 0.0
        %2122 = vadd.xlane.f32.xlu0 %v2121
        %v2123 = vpop.xlane.xlu0 %2122
        %v2124 = vmul.f32 %v2123, %v1910
        %v2125 = vadd.f32 %v2124, 1e-05
        %v2126 = vrsqrt.pop %v2125
        %v2127 = vmul.f32 %v2119, %v2126
        %v2129 = vlaneseq
        %v2130 = vshrl.u32 %v2129, 7
        %v2131 = vsub.s32 0, %v2130
        %v2132 = vrot.slane %v2113, %v2131
        %v2134 = vmul.f32 %v2127, %v2132
        %v2136 = vlaneseq
        %v2137 = vshrl.u32 %v2136, 7
        %v2138 = vsub.s32 0, %v2137
        %v2139 = vrot.slane %v2114, %v2138
        %v2141 = vadd.f32 %v2134, %v2139
        %2142 = vst.msk [vmem:[%s858] sm:$0xff] %vm872, %v2141
        %s2143 = sand.u32 %s541, 1
        %s2144 = scalar_lea.sflag [#allocation4], %s2143
        %s2145 = sand.u32 %s541, 1
        %s2146 = smul.addr %s2145, 8
        %s2147 = scalar_lea.vmem [#allocation20], %s2146
        // Predicated region
        $region157: #{tpu_custom_call.1} parent=111 // pred_check
          %p2148 = pneg %p551
        $region158: #{tpu_custom_call.1} parent=111 // pred_check_branch
          %2150 = sbr.rel (%p2148) target = $region160
        $region159: #{tpu_custom_call.1} parent=111 // pred_region
          %s2152 = ssub.s32 128, 128
          %2153 = vsyncadd %s2144, %s2152
          %s2154 = smul.addr %s45, 128
          %s2155 = scalar_lea.hbm %s23, %s2154
          %s2157 = sshll.u32 %s2147, 4
          %s2158 = int_to_ptr.vmem [resolvable:$true] %s2157
          %2160 = dma.vmem_to_hbm [thread:$0]  %s2158, 128, %s2155, %s2144
        $region160: #{tpu_custom_call.1} parent=111 // pred_fallthru
          _
      $region112: #{tpu_custom_call.1} parent=5 // pred_fallthru
        _
      %p2161 = scmp.le.s32.totalorder 2, %s40
      // Predicated region
      $region161: #{tpu_custom_call.1} parent=5 // pred_check
        %p2162 = pneg %p2161
      $region162: #{tpu_custom_call.1} parent=5 // pred_check_branch
        %2164 = sbr.rel (%p2162) target = $region164
      $region163: #{tpu_custom_call.1} parent=5 // pred_region
        %s2165 = ssub.s32 %s40, 2
        // Predicated region
        $region165: #{tpu_custom_call.1} parent=163 // pred_check
          %p2166 = pneg %p557
        $region166: #{tpu_custom_call.1} parent=163 // pred_check_branch
          %2168 = sbr.rel (%p2166) target = $region168
        $region167: #{tpu_custom_call.1} parent=163 // pred_region
          %s2169 = sand.u32 %s542, 1
          %s2170 = scalar_lea.sflag [#allocation4], %s2169
          %s2171 = sand.u32 %s542, 1
          %s2172 = smul.addr %s2171, 8
          %s2173 = scalar_lea.vmem [#allocation20], %s2172
          %2174 = dma.done %s2170, 128
        $region168: #{tpu_custom_call.1} parent=163 // pred_fallthru
          _
      $region164: #{tpu_custom_call.1} parent=5 // pred_fallthru
        _
    $region6: #{tpu_custom_call.1} parent=1 // loop_footer
      %s44 = sadd.s32 1, %s40
    $region7: #{tpu_custom_call.1} parent=1 // loop_footer_branch
      %39 = sbr.rel target = $region3
    $region8: #{tpu_custom_call.1} parent=1 // loop_exit
      _
    %2175 = vsyncpa [#allocation3], 1
    %s2176 = scalar_lea.sflag [#allocation3], 1
    %2177 = vsyncpa %s2176, 1
    %2178 = vsyncpa [#allocation6], 1
    %2179 = vsyncpa [#allocation9], 1
    %2180 = vsyncpa [#allocation12], 1
    %2181 = vsyncpa [#allocation15], 1
    %2182 = vsyncpa [#allocation18], 1
    %2183 = vsyncpa [#allocation4], 1
    %s2184 = scalar_lea.sflag [#allocation4], 1
    %2185 = vsyncpa %s2184, 1

</llo_original>
